<compile_context>
chip_gen: v6e
topology: v6e:2x2x1
jax: 0.10.0
libtpu: 0.0.40
codegen_flags: <defaults>
</compile_context>

<pallas_src>
import jax
import jax.numpy as jnp
from jax.experimental import pallas as pl
from jax.experimental.pallas import tpu as pltpu

INPUT_SIZE = 45
HIDDEN_SIZE = 128
K_PAD = 64        # contraction dim 45 zero-padded to a sublane multiple
OUT_PAD = 128     # lane-dense output width (slice [:, :45] outside the kernel)
_UNROLL_T = 16    # full Python unroll only for short sequences


def _round_up(a, m):
    return ((a + m - 1) // m) * m


def _choose_batch_tile(batch, max_tile=128):
    """Batch tile: multiple of 8 sublanes; >= 2 tiles once the padded batch reaches
    128 rows so v7x's 2 TensorCores both get work (no-op on 1-TC v5e/v6e).
    max_tile can be raised to 256 on v6e for very large batches to fill its
    256-wide MXU; keep 128 on v5e."""
    b8 = _round_up(batch, 8)
    if b8 < 128:
        return b8
    return min(max_tile, _round_up(pl.cdiv(b8, 2), 8))


def lstm_fc_kernel(x_ref, wih_ref, whh_ref, b_ref, wfc_ref, bfc_ref,
                   out_ref, hn_ref, cn_ref, xproj_ref):
    """x_ref: (T, TB, 64); wih_ref: (64, 512); whh_ref: (128, 512); b_ref: (1, 512);
    wfc_ref: (128, 128); bfc_ref: (1, 128).
    Outputs (per batch tile): out_ref (TB, 128), hn_ref (TB, 128), cn_ref (TB, 128).
    xproj_ref: VMEM scratch (T*TB, 512) for the rolled-loop path."""
    H = HIDDEN_SIZE
    T, B, K = x_ref.shape

    # --- Hoisted input projection: one matmul for all timesteps -------------
    x_all = x_ref[...].reshape(T * B, K)
    x_proj = (jnp.dot(x_all, wih_ref[...], preferred_element_type=jnp.float32)
              + b_ref[...])                       # (T*B, 4H); PyTorch gate order i,f,g,o

    whh = whh_ref[...]                            # (128, 4H), loaded once for all steps

    def _sigmoid(v):
        # Single EUP tanh per gate (exact identity; no exp + reciprocal chain).
        return 0.5 * (jnp.tanh(0.5 * v) + 1.0)

    def step(xg, hc):
        h, c = hc
        gates = xg + jnp.dot(h, whh, preferred_element_type=jnp.float32)  # (B, 4H)
        i_g = _sigmoid(gates[:, 0:H])
        f_g = _sigmoid(gates[:, H:2 * H])
        g_g = jnp.tanh(gates[:, 2 * H:3 * H])
        o_g = _sigmoid(gates[:, 3 * H:4 * H])
        c = f_g * c + i_g * g_g
        h = o_g * jnp.tanh(c)
        return h, c

    h0 = jnp.zeros((B, H), jnp.float32)
    c0 = jnp.zeros((B, H), jnp.float32)

    if T <= _UNROLL_T:
        # Short sequences: full unroll, h/c carried in vregs, static slices.
        h, c = h0, c0
        for t in range(T):
            h, c = step(x_proj[t * B:(t + 1) * B, :], (h, c))
    else:
        # Realistic T: park x_proj in VMEM and run a rolled loop with (h, c) carries
        # to bound vreg pressure / code size.
        xproj_ref[...] = x_proj

        def body(t, hc):
            row0 = pl.multiple_of(t * B, 8)       # B is a multiple of 8 sublanes
            return step(xproj_ref[pl.ds(row0, B), :], hc)

        h, c = jax.lax.fori_loop(0, T, body, (h0, c0))

    hn_ref[...] = h
    cn_ref[...] = c
    logits = (jnp.dot(h, wfc_ref[...], preferred_element_type=jnp.float32)
              + bfc_ref[...])                     # (B, 128) lane-dense
    out_ref[...] = _sigmoid(logits)


def init_params(key):
    """Deterministic init matching PyTorch LSTM/Linear shapes (uniform +-1/sqrt(H))."""
    k = 1.0 / jnp.sqrt(jnp.float32(HIDDEN_SIZE))
    keys = jax.random.split(key, 6)
    u = lambda kk, shape: jax.random.uniform(kk, shape, jnp.float32, -k, k)
    return {
        "w_ih": u(keys[0], (4 * HIDDEN_SIZE, INPUT_SIZE)),   # lstm.weight_ih_l0
        "w_hh": u(keys[1], (4 * HIDDEN_SIZE, HIDDEN_SIZE)),  # lstm.weight_hh_l0
        "b_ih": u(keys[2], (4 * HIDDEN_SIZE,)),              # lstm.bias_ih_l0
        "b_hh": u(keys[3], (4 * HIDDEN_SIZE,)),              # lstm.bias_hh_l0
        "w_fc": u(keys[4], (INPUT_SIZE, HIDDEN_SIZE)),       # fc.weight
        "b_fc": u(keys[5], (INPUT_SIZE,)),                   # fc.bias
    }


def lotto_forward(x, params, *, batch_tile=128):
    B, T, _ = x.shape
    TB = _choose_batch_tile(B, batch_tile)
    Bp = _round_up(B, TB)

    # (B, T, 45) -> time-major, batch padded to Bp, contraction padded 45 -> 64.
    x_tm = jnp.transpose(x, (1, 0, 2))
    x_tm = jnp.pad(x_tm, ((0, 0), (0, Bp - B), (0, K_PAD - INPUT_SIZE)))

    wih_t = jnp.pad(params["w_ih"].T, ((0, K_PAD - INPUT_SIZE), (0, 0)))   # (64, 512)
    whh_t = params["w_hh"].T                                               # (128, 512)
    b = (params["b_ih"] + params["b_hh"]).reshape(1, 4 * HIDDEN_SIZE)      # (1, 512)
    wfc_t = jnp.pad(params["w_fc"].T, ((0, 0), (0, OUT_PAD - INPUT_SIZE)))  # (128, 128)
    bfc = jnp.pad(params["b_fc"], (0, OUT_PAD - INPUT_SIZE)).reshape(1, OUT_PAD)

    # Explicit VMEM budget: x block (double-buffered, lane-padded to 128) + x_proj
    # scratch/intermediate + weights/outputs headroom, capped at v7x's 64 MiB.
    vmem_est = (2 * T * TB * 128 * 4
                + 2 * T * TB * 4 * HIDDEN_SIZE * 4
                + 8 * 1024 * 1024)
    vmem_limit = int(min(max(vmem_est, 32 * 1024 * 1024), 64 * 1024 * 1024))

    out, h_n, c_n = pl.pallas_call(
        lstm_fc_kernel,
        out_shape=(
            jax.ShapeDtypeStruct((Bp, OUT_PAD), jnp.float32),
            jax.ShapeDtypeStruct((Bp, HIDDEN_SIZE), jnp.float32),
            jax.ShapeDtypeStruct((Bp, HIDDEN_SIZE), jnp.float32),
        ),
        grid_spec=pltpu.PrefetchScalarGridSpec(
            num_scalar_prefetch=0,
            grid=(Bp // TB,),
            in_specs=[
                pl.BlockSpec((T, TB, K_PAD), lambda i: (0, i, 0)),
                pl.BlockSpec((K_PAD, 4 * HIDDEN_SIZE), lambda i: (0, 0)),
                pl.BlockSpec((HIDDEN_SIZE, 4 * HIDDEN_SIZE), lambda i: (0, 0)),
                pl.BlockSpec((1, 4 * HIDDEN_SIZE), lambda i: (0, 0)),
                pl.BlockSpec((HIDDEN_SIZE, OUT_PAD), lambda i: (0, 0)),
                pl.BlockSpec((1, OUT_PAD), lambda i: (0, 0)),
            ],
            out_specs=(
                pl.BlockSpec((TB, OUT_PAD), lambda i: (i, 0)),
                pl.BlockSpec((TB, HIDDEN_SIZE), lambda i: (i, 0)),
                pl.BlockSpec((TB, HIDDEN_SIZE), lambda i: (i, 0)),
            ),
            scratch_shapes=[pltpu.VMEM((T * TB, 4 * HIDDEN_SIZE), jnp.float32)],
        ),
        compiler_params=pltpu.CompilerParams(
            dimension_semantics=("parallel",),      # shards batch tiles across TCs on v7x
            vmem_limit_bytes=vmem_limit),
    )(x_tm, wih_t, whh_t, b, wfc_t, bfc)

    out = out[:B, :INPUT_SIZE]                      # drop padded batch rows / lanes
    h_n, c_n = h_n[:B], c_n[:B]
    # Match PyTorch: hidden = (h_n, c_n), each (num_layers=1, B, 128)
    return out, (h_n[None, :, :], c_n[None, :, :])


def reference_forward(x, params):
    """Pure-JAX reference mirroring torch.nn.LSTM + Linear + Sigmoid."""
    B, T, _ = x.shape
    h = jnp.zeros((B, HIDDEN_SIZE), jnp.float32)
    c = jnp.zeros((B, HIDDEN_SIZE), jnp.float32)
    wih_t = params["w_ih"].T
    whh_t = params["w_hh"].T
    b = params["b_ih"] + params["b_hh"]
    for t in range(T):
        gates = x[:, t, :] @ wih_t + h @ whh_t + b
        i, f, g, o = jnp.split(gates, 4, axis=-1)
        i, f, g, o = jax.nn.sigmoid(i), jax.nn.sigmoid(f), jnp.tanh(g), jax.nn.sigmoid(o)
        c = f * c + i * g
        h = o * jnp.tanh(c)
    out = jax.nn.sigmoid(h @ params["w_fc"].T + params["b_fc"])
    return out, (h[None], c[None])


def _check(x, params):
    out, (h_n, c_n) = lotto_forward(x, params)
    jax.block_until_ready((out, h_n, c_n))
    out_ref, (h_ref, c_ref) = reference_forward(x, params)
    B = x.shape[0]
    assert out.shape == (B, INPUT_SIZE)
    assert h_n.shape == (1, B, HIDDEN_SIZE) and c_n.shape == (1, B, HIDDEN_SIZE)
    assert jnp.allclose(out, out_ref, atol=1e-5, rtol=1e-5)
    assert jnp.allclose(h_n, h_ref, atol=1e-5, rtol=1e-5)
    assert jnp.allclose(c_n, c_ref, atol=1e-5, rtol=1e-5)


if __name__ == "__main__":
    key = jax.random.PRNGKey(0)
    pkey, xkey1, xkey2 = jax.random.split(key, 3)
    params = init_params(pkey)

    # Small demo shapes: exercises the fully-unrolled path (T <= 16) ...
    x_small = jax.random.uniform(xkey1, (2, 8, INPUT_SIZE), jnp.float32)
    _check(x_small, params)

    # ... and the rolled fori_loop path (T > 16) with batch padding (B=3 -> 8).
    x_long = jax.random.uniform(xkey2, (3, 24, INPUT_SIZE), jnp.float32)
    _check(x_long, params)

    print("KERNEL_OK")
</pallas_src>

<mosaic_0001>
module attributes {stable_mosaic.version = 11 : i64} {
  func.func @lstm_fc_kernel(%arg0: i32, %arg1: memref<8x8x64xf32, #tpu.memory_space<vmem>>, %arg2: memref<64x512xf32, #tpu.memory_space<vmem>>, %arg3: memref<128x512xf32, #tpu.memory_space<vmem>>, %arg4: memref<1x512xf32, #tpu.memory_space<vmem>>, %arg5: memref<128x128xf32, #tpu.memory_space<vmem>>, %arg6: memref<1x128xf32, #tpu.memory_space<vmem>>, %arg7: memref<8x128xf32, #tpu.memory_space<vmem>>, %arg8: memref<8x128xf32, #tpu.memory_space<vmem>>, %arg9: memref<8x128xf32, #tpu.memory_space<vmem>>, %arg10: memref<64x512xf32, #tpu.memory_space<vmem>>) attributes {dimension_semantics = [#tpu.dimension_semantics<parallel>], iteration_bounds = array<i64: 1>, scalar_prefetch = 0 : i64, scratch_operands = 1 : i64, tpu.core_type = #tpu.core_type<tc>, window_params = [{transform_indices = @transform_0, window_bounds = array<i64: 8, 8, 64>}, {pipeline_mode = #tpu.pipeline_mode<synchronous>, transform_indices = @transform_1, window_bounds = array<i64: 64, 512>}, {pipeline_mode = #tpu.pipeline_mode<synchronous>, transform_indices = @transform_2, window_bounds = array<i64: 128, 512>}, {pipeline_mode = #tpu.pipeline_mode<synchronous>, transform_indices = @transform_3, window_bounds = array<i64: 1, 512>}, {pipeline_mode = #tpu.pipeline_mode<synchronous>, transform_indices = @transform_4, window_bounds = array<i64: 128, 128>}, {pipeline_mode = #tpu.pipeline_mode<synchronous>, transform_indices = @transform_5, window_bounds = array<i64: 1, 128>}, {transform_indices = @transform_6, window_bounds = array<i64: 8, 128>}, {transform_indices = @transform_7, window_bounds = array<i64: 8, 128>}, {transform_indices = @transform_8, window_bounds = array<i64: 8, 128>}]} {
    %c0 = arith.constant 0 : index
    %c0_0 = arith.constant 0 : index
    %c0_1 = arith.constant 0 : index
    %0 = vector.load %arg1[%c0, %c0_0, %c0_1] : memref<8x8x64xf32, #tpu.memory_space<vmem>>, vector<8x8x64xf32>
    %1 = vector.shape_cast %0 : vector<8x8x64xf32> to vector<64x64xf32>
    %c0_2 = arith.constant 0 : index
    %c0_3 = arith.constant 0 : index
    %2 = vector.load %arg2[%c0_2, %c0_3] : memref<64x512xf32, #tpu.memory_space<vmem>>, vector<64x512xf32>
    %cst = arith.constant dense<0.000000e+00> : vector<64x512xf32>
    %3 = tpu.matmul %1, %2, %cst {dimension_numbers = #tpu.dot_dimension_numbers<[1], [0], [0], [1], [0, 0, 1, 1], [], []>} : vector<64x64xf32>, vector<64x512xf32>, vector<64x512xf32> -> vector<64x512xf32>
    %c0_4 = arith.constant 0 : index
    %c0_5 = arith.constant 0 : index
    %4 = vector.load %arg4[%c0_4, %c0_5] : memref<1x512xf32, #tpu.memory_space<vmem>>, vector<1x512xf32>
    %5 = vector.broadcast %4 : vector<1x512xf32> to vector<64x512xf32>
    %6 = arith.addf %3, %5 : vector<64x512xf32>
    %c0_6 = arith.constant 0 : index
    %c0_7 = arith.constant 0 : index
    %7 = vector.load %arg3[%c0_6, %c0_7] : memref<128x512xf32, #tpu.memory_space<vmem>>, vector<128x512xf32>
    %cst_8 = arith.constant 0.000000e+00 : f32
    %8 = vector.broadcast %cst_8 : f32 to vector<8x128xf32>
    %cst_9 = arith.constant 0.000000e+00 : f32
    %9 = vector.broadcast %cst_9 : f32 to vector<8x128xf32>
    %10 = vector.extract_strided_slice %6 {offsets = [0, 0], sizes = [8, 512], strides = [1, 1]} : vector<64x512xf32> to vector<8x512xf32>
    %cst_10 = arith.constant dense<0.000000e+00> : vector<8x512xf32>
    %11 = tpu.matmul %8, %7, %cst_10 {dimension_numbers = #tpu.dot_dimension_numbers<[1], [0], [0], [1], [0, 0, 1, 1], [], []>} : vector<8x128xf32>, vector<128x512xf32>, vector<8x512xf32> -> vector<8x512xf32>
    %12 = arith.addf %10, %11 : vector<8x512xf32>
    %13 = vector.extract_strided_slice %12 {offsets = [0, 0], sizes = [8, 128], strides = [1, 1]} : vector<8x512xf32> to vector<8x128xf32>
    %cst_11 = arith.constant 5.000000e-01 : f32
    %14 = vector.broadcast %cst_11 : f32 to vector<8x128xf32>
    %15 = arith.mulf %14, %13 : vector<8x128xf32>
    %16 = math.tanh %15 : vector<8x128xf32>
    %cst_12 = arith.constant 1.000000e+00 : f32
    %17 = vector.broadcast %cst_12 : f32 to vector<8x128xf32>
    %18 = arith.addf %16, %17 : vector<8x128xf32>
    %cst_13 = arith.constant 5.000000e-01 : f32
    %19 = vector.broadcast %cst_13 : f32 to vector<8x128xf32>
    %20 = arith.mulf %19, %18 : vector<8x128xf32>
    %21 = vector.extract_strided_slice %12 {offsets = [0, 128], sizes = [8, 128], strides = [1, 1]} : vector<8x512xf32> to vector<8x128xf32>
    %cst_14 = arith.constant 5.000000e-01 : f32
    %22 = vector.broadcast %cst_14 : f32 to vector<8x128xf32>
    %23 = arith.mulf %22, %21 : vector<8x128xf32>
    %24 = math.tanh %23 : vector<8x128xf32>
    %cst_15 = arith.constant 1.000000e+00 : f32
    %25 = vector.broadcast %cst_15 : f32 to vector<8x128xf32>
    %26 = arith.addf %24, %25 : vector<8x128xf32>
    %cst_16 = arith.constant 5.000000e-01 : f32
    %27 = vector.broadcast %cst_16 : f32 to vector<8x128xf32>
    %28 = arith.mulf %27, %26 : vector<8x128xf32>
    %29 = vector.extract_strided_slice %12 {offsets = [0, 256], sizes = [8, 128], strides = [1, 1]} : vector<8x512xf32> to vector<8x128xf32>
    %30 = math.tanh %29 : vector<8x128xf32>
    %31 = vector.extract_strided_slice %12 {offsets = [0, 384], sizes = [8, 128], strides = [1, 1]} : vector<8x512xf32> to vector<8x128xf32>
    %cst_17 = arith.constant 5.000000e-01 : f32
    %32 = vector.broadcast %cst_17 : f32 to vector<8x128xf32>
    %33 = arith.mulf %32, %31 : vector<8x128xf32>
    %34 = math.tanh %33 : vector<8x128xf32>
    %cst_18 = arith.constant 1.000000e+00 : f32
    %35 = vector.broadcast %cst_18 : f32 to vector<8x128xf32>
    %36 = arith.addf %34, %35 : vector<8x128xf32>
    %cst_19 = arith.constant 5.000000e-01 : f32
    %37 = vector.broadcast %cst_19 : f32 to vector<8x128xf32>
    %38 = arith.mulf %37, %36 : vector<8x128xf32>
    %39 = arith.mulf %28, %9 : vector<8x128xf32>
    %40 = arith.mulf %20, %30 : vector<8x128xf32>
    %41 = arith.addf %39, %40 : vector<8x128xf32>
    %42 = math.tanh %41 : vector<8x128xf32>
    %43 = arith.mulf %38, %42 : vector<8x128xf32>
    %44 = vector.extract_strided_slice %6 {offsets = [8, 0], sizes = [8, 512], strides = [1, 1]} : vector<64x512xf32> to vector<8x512xf32>
    %cst_20 = arith.constant dense<0.000000e+00> : vector<8x512xf32>
    %45 = tpu.matmul %43, %7, %cst_20 {dimension_numbers = #tpu.dot_dimension_numbers<[1], [0], [0], [1], [0, 0, 1, 1], [], []>} : vector<8x128xf32>, vector<128x512xf32>, vector<8x512xf32> -> vector<8x512xf32>
    %46 = arith.addf %44, %45 : vector<8x512xf32>
    %47 = vector.extract_strided_slice %46 {offsets = [0, 0], sizes = [8, 128], strides = [1, 1]} : vector<8x512xf32> to vector<8x128xf32>
    %cst_21 = arith.constant 5.000000e-01 : f32
    %48 = vector.broadcast %cst_21 : f32 to vector<8x128xf32>
    %49 = arith.mulf %48, %47 : vector<8x128xf32>
    %50 = math.tanh %49 : vector<8x128xf32>
    %cst_22 = arith.constant 1.000000e+00 : f32
    %51 = vector.broadcast %cst_22 : f32 to vector<8x128xf32>
    %52 = arith.addf %50, %51 : vector<8x128xf32>
    %cst_23 = arith.constant 5.000000e-01 : f32
    %53 = vector.broadcast %cst_23 : f32 to vector<8x128xf32>
    %54 = arith.mulf %53, %52 : vector<8x128xf32>
    %55 = vector.extract_strided_slice %46 {offsets = [0, 128], sizes = [8, 128], strides = [1, 1]} : vector<8x512xf32> to vector<8x128xf32>
    %cst_24 = arith.constant 5.000000e-01 : f32
    %56 = vector.broadcast %cst_24 : f32 to vector<8x128xf32>
    %57 = arith.mulf %56, %55 : vector<8x128xf32>
    %58 = math.tanh %57 : vector<8x128xf32>
    %cst_25 = arith.constant 1.000000e+00 : f32
    %59 = vector.broadcast %cst_25 : f32 to vector<8x128xf32>
    %60 = arith.addf %58, %59 : vector<8x128xf32>
    %cst_26 = arith.constant 5.000000e-01 : f32
    %61 = vector.broadcast %cst_26 : f32 to vector<8x128xf32>
    %62 = arith.mulf %61, %60 : vector<8x128xf32>
    %63 = vector.extract_strided_slice %46 {offsets = [0, 256], sizes = [8, 128], strides = [1, 1]} : vector<8x512xf32> to vector<8x128xf32>
    %64 = math.tanh %63 : vector<8x128xf32>
    %65 = vector.extract_strided_slice %46 {offsets = [0, 384], sizes = [8, 128], strides = [1, 1]} : vector<8x512xf32> to vector<8x128xf32>
    %cst_27 = arith.constant 5.000000e-01 : f32
    %66 = vector.broadcast %cst_27 : f32 to vector<8x128xf32>
    %67 = arith.mulf %66, %65 : vector<8x128xf32>
    %68 = math.tanh %67 : vector<8x128xf32>
    %cst_28 = arith.constant 1.000000e+00 : f32
    %69 = vector.broadcast %cst_28 : f32 to vector<8x128xf32>
    %70 = arith.addf %68, %69 : vector<8x128xf32>
    %cst_29 = arith.constant 5.000000e-01 : f32
    %71 = vector.broadcast %cst_29 : f32 to vector<8x128xf32>
    %72 = arith.mulf %71, %70 : vector<8x128xf32>
    %73 = arith.mulf %62, %41 : vector<8x128xf32>
    %74 = arith.mulf %54, %64 : vector<8x128xf32>
    %75 = arith.addf %73, %74 : vector<8x128xf32>
    %76 = math.tanh %75 : vector<8x128xf32>
    %77 = arith.mulf %72, %76 : vector<8x128xf32>
    %78 = vector.extract_strided_slice %6 {offsets = [16, 0], sizes = [8, 512], strides = [1, 1]} : vector<64x512xf32> to vector<8x512xf32>
    %cst_30 = arith.constant dense<0.000000e+00> : vector<8x512xf32>
    %79 = tpu.matmul %77, %7, %cst_30 {dimension_numbers = #tpu.dot_dimension_numbers<[1], [0], [0], [1], [0, 0, 1, 1], [], []>} : vector<8x128xf32>, vector<128x512xf32>, vector<8x512xf32> -> vector<8x512xf32>
    %80 = arith.addf %78, %79 : vector<8x512xf32>
    %81 = vector.extract_strided_slice %80 {offsets = [0, 0], sizes = [8, 128], strides = [1, 1]} : vector<8x512xf32> to vector<8x128xf32>
    %cst_31 = arith.constant 5.000000e-01 : f32
    %82 = vector.broadcast %cst_31 : f32 to vector<8x128xf32>
    %83 = arith.mulf %82, %81 : vector<8x128xf32>
    %84 = math.tanh %83 : vector<8x128xf32>
    %cst_32 = arith.constant 1.000000e+00 : f32
    %85 = vector.broadcast %cst_32 : f32 to vector<8x128xf32>
    %86 = arith.addf %84, %85 : vector<8x128xf32>
    %cst_33 = arith.constant 5.000000e-01 : f32
    %87 = vector.broadcast %cst_33 : f32 to vector<8x128xf32>
    %88 = arith.mulf %87, %86 : vector<8x128xf32>
    %89 = vector.extract_strided_slice %80 {offsets = [0, 128], sizes = [8, 128], strides = [1, 1]} : vector<8x512xf32> to vector<8x128xf32>
    %cst_34 = arith.constant 5.000000e-01 : f32
    %90 = vector.broadcast %cst_34 : f32 to vector<8x128xf32>
    %91 = arith.mulf %90, %89 : vector<8x128xf32>
    %92 = math.tanh %91 : vector<8x128xf32>
    %cst_35 = arith.constant 1.000000e+00 : f32
    %93 = vector.broadcast %cst_35 : f32 to vector<8x128xf32>
    %94 = arith.addf %92, %93 : vector<8x128xf32>
    %cst_36 = arith.constant 5.000000e-01 : f32
    %95 = vector.broadcast %cst_36 : f32 to vector<8x128xf32>
    %96 = arith.mulf %95, %94 : vector<8x128xf32>
    %97 = vector.extract_strided_slice %80 {offsets = [0, 256], sizes = [8, 128], strides = [1, 1]} : vector<8x512xf32> to vector<8x128xf32>
    %98 = math.tanh %97 : vector<8x128xf32>
    %99 = vector.extract_strided_slice %80 {offsets = [0, 384], sizes = [8, 128], strides = [1, 1]} : vector<8x512xf32> to vector<8x128xf32>
    %cst_37 = arith.constant 5.000000e-01 : f32
    %100 = vector.broadcast %cst_37 : f32 to vector<8x128xf32>
    %101 = arith.mulf %100, %99 : vector<8x128xf32>
    %102 = math.tanh %101 : vector<8x128xf32>
    %cst_38 = arith.constant 1.000000e+00 : f32
    %103 = vector.broadcast %cst_38 : f32 to vector<8x128xf32>
    %104 = arith.addf %102, %103 : vector<8x128xf32>
    %cst_39 = arith.constant 5.000000e-01 : f32
    %105 = vector.broadcast %cst_39 : f32 to vector<8x128xf32>
    %106 = arith.mulf %105, %104 : vector<8x128xf32>
    %107 = arith.mulf %96, %75 : vector<8x128xf32>
    %108 = arith.mulf %88, %98 : vector<8x128xf32>
    %109 = arith.addf %107, %108 : vector<8x128xf32>
    %110 = math.tanh %109 : vector<8x128xf32>
    %111 = arith.mulf %106, %110 : vector<8x128xf32>
    %112 = vector.extract_strided_slice %6 {offsets = [24, 0], sizes = [8, 512], strides = [1, 1]} : vector<64x512xf32> to vector<8x512xf32>
    %cst_40 = arith.constant dense<0.000000e+00> : vector<8x512xf32>
    %113 = tpu.matmul %111, %7, %cst_40 {dimension_numbers = #tpu.dot_dimension_numbers<[1], [0], [0], [1], [0, 0, 1, 1], [], []>} : vector<8x128xf32>, vector<128x512xf32>, vector<8x512xf32> -> vector<8x512xf32>
    %114 = arith.addf %112, %113 : vector<8x512xf32>
    %115 = vector.extract_strided_slice %114 {offsets = [0, 0], sizes = [8, 128], strides = [1, 1]} : vector<8x512xf32> to vector<8x128xf32>
    %cst_41 = arith.constant 5.000000e-01 : f32
    %116 = vector.broadcast %cst_41 : f32 to vector<8x128xf32>
    %117 = arith.mulf %116, %115 : vector<8x128xf32>
    %118 = math.tanh %117 : vector<8x128xf32>
    %cst_42 = arith.constant 1.000000e+00 : f32
    %119 = vector.broadcast %cst_42 : f32 to vector<8x128xf32>
    %120 = arith.addf %118, %119 : vector<8x128xf32>
    %cst_43 = arith.constant 5.000000e-01 : f32
    %121 = vector.broadcast %cst_43 : f32 to vector<8x128xf32>
    %122 = arith.mulf %121, %120 : vector<8x128xf32>
    %123 = vector.extract_strided_slice %114 {offsets = [0, 128], sizes = [8, 128], strides = [1, 1]} : vector<8x512xf32> to vector<8x128xf32>
    %cst_44 = arith.constant 5.000000e-01 : f32
    %124 = vector.broadcast %cst_44 : f32 to vector<8x128xf32>
    %125 = arith.mulf %124, %123 : vector<8x128xf32>
    %126 = math.tanh %125 : vector<8x128xf32>
    %cst_45 = arith.constant 1.000000e+00 : f32
    %127 = vector.broadcast %cst_45 : f32 to vector<8x128xf32>
    %128 = arith.addf %126, %127 : vector<8x128xf32>
    %cst_46 = arith.constant 5.000000e-01 : f32
    %129 = vector.broadcast %cst_46 : f32 to vector<8x128xf32>
    %130 = arith.mulf %129, %128 : vector<8x128xf32>
    %131 = vector.extract_strided_slice %114 {offsets = [0, 256], sizes = [8, 128], strides = [1, 1]} : vector<8x512xf32> to vector<8x128xf32>
    %132 = math.tanh %131 : vector<8x128xf32>
    %133 = vector.extract_strided_slice %114 {offsets = [0, 384], sizes = [8, 128], strides = [1, 1]} : vector<8x512xf32> to vector<8x128xf32>
    %cst_47 = arith.constant 5.000000e-01 : f32
    %134 = vector.broadcast %cst_47 : f32 to vector<8x128xf32>
    %135 = arith.mulf %134, %133 : vector<8x128xf32>
    %136 = math.tanh %135 : vector<8x128xf32>
    %cst_48 = arith.constant 1.000000e+00 : f32
    %137 = vector.broadcast %cst_48 : f32 to vector<8x128xf32>
    %138 = arith.addf %136, %137 : vector<8x128xf32>
    %cst_49 = arith.constant 5.000000e-01 : f32
    %139 = vector.broadcast %cst_49 : f32 to vector<8x128xf32>
    %140 = arith.mulf %139, %138 : vector<8x128xf32>
    %141 = arith.mulf %130, %109 : vector<8x128xf32>
    %142 = arith.mulf %122, %132 : vector<8x128xf32>
    %143 = arith.addf %141, %142 : vector<8x128xf32>
    %144 = math.tanh %143 : vector<8x128xf32>
    %145 = arith.mulf %140, %144 : vector<8x128xf32>
    %146 = vector.extract_strided_slice %6 {offsets = [32, 0], sizes = [8, 512], strides = [1, 1]} : vector<64x512xf32> to vector<8x512xf32>
    %cst_50 = arith.constant dense<0.000000e+00> : vector<8x512xf32>
    %147 = tpu.matmul %145, %7, %cst_50 {dimension_numbers = #tpu.dot_dimension_numbers<[1], [0], [0], [1], [0, 0, 1, 1], [], []>} : vector<8x128xf32>, vector<128x512xf32>, vector<8x512xf32> -> vector<8x512xf32>
    %148 = arith.addf %146, %147 : vector<8x512xf32>
    %149 = vector.extract_strided_slice %148 {offsets = [0, 0], sizes = [8, 128], strides = [1, 1]} : vector<8x512xf32> to vector<8x128xf32>
    %cst_51 = arith.constant 5.000000e-01 : f32
    %150 = vector.broadcast %cst_51 : f32 to vector<8x128xf32>
    %151 = arith.mulf %150, %149 : vector<8x128xf32>
    %152 = math.tanh %151 : vector<8x128xf32>
    %cst_52 = arith.constant 1.000000e+00 : f32
    %153 = vector.broadcast %cst_52 : f32 to vector<8x128xf32>
    %154 = arith.addf %152, %153 : vector<8x128xf32>
    %cst_53 = arith.constant 5.000000e-01 : f32
    %155 = vector.broadcast %cst_53 : f32 to vector<8x128xf32>
    %156 = arith.mulf %155, %154 : vector<8x128xf32>
    %157 = vector.extract_strided_slice %148 {offsets = [0, 128], sizes = [8, 128], strides = [1, 1]} : vector<8x512xf32> to vector<8x128xf32>
    %cst_54 = arith.constant 5.000000e-01 : f32
    %158 = vector.broadcast %cst_54 : f32 to vector<8x128xf32>
    %159 = arith.mulf %158, %157 : vector<8x128xf32>
    %160 = math.tanh %159 : vector<8x128xf32>
    %cst_55 = arith.constant 1.000000e+00 : f32
    %161 = vector.broadcast %cst_55 : f32 to vector<8x128xf32>
    %162 = arith.addf %160, %161 : vector<8x128xf32>
    %cst_56 = arith.constant 5.000000e-01 : f32
    %163 = vector.broadcast %cst_56 : f32 to vector<8x128xf32>
    %164 = arith.mulf %163, %162 : vector<8x128xf32>
    %165 = vector.extract_strided_slice %148 {offsets = [0, 256], sizes = [8, 128], strides = [1, 1]} : vector<8x512xf32> to vector<8x128xf32>
    %166 = math.tanh %165 : vector<8x128xf32>
    %167 = vector.extract_strided_slice %148 {offsets = [0, 384], sizes = [8, 128], strides = [1, 1]} : vector<8x512xf32> to vector<8x128xf32>
    %cst_57 = arith.constant 5.000000e-01 : f32
    %168 = vector.broadcast %cst_57 : f32 to vector<8x128xf32>
    %169 = arith.mulf %168, %167 : vector<8x128xf32>
    %170 = math.tanh %169 : vector<8x128xf32>
    %cst_58 = arith.constant 1.000000e+00 : f32
    %171 = vector.broadcast %cst_58 : f32 to vector<8x128xf32>
    %172 = arith.addf %170, %171 : vector<8x128xf32>
    %cst_59 = arith.constant 5.000000e-01 : f32
    %173 = vector.broadcast %cst_59 : f32 to vector<8x128xf32>
    %174 = arith.mulf %173, %172 : vector<8x128xf32>
    %175 = arith.mulf %164, %143 : vector<8x128xf32>
    %176 = arith.mulf %156, %166 : vector<8x128xf32>
    %177 = arith.addf %175, %176 : vector<8x128xf32>
    %178 = math.tanh %177 : vector<8x128xf32>
    %179 = arith.mulf %174, %178 : vector<8x128xf32>
    %180 = vector.extract_strided_slice %6 {offsets = [40, 0], sizes = [8, 512], strides = [1, 1]} : vector<64x512xf32> to vector<8x512xf32>
    %cst_60 = arith.constant dense<0.000000e+00> : vector<8x512xf32>
    %181 = tpu.matmul %179, %7, %cst_60 {dimension_numbers = #tpu.dot_dimension_numbers<[1], [0], [0], [1], [0, 0, 1, 1], [], []>} : vector<8x128xf32>, vector<128x512xf32>, vector<8x512xf32> -> vector<8x512xf32>
    %182 = arith.addf %180, %181 : vector<8x512xf32>
    %183 = vector.extract_strided_slice %182 {offsets = [0, 0], sizes = [8, 128], strides = [1, 1]} : vector<8x512xf32> to vector<8x128xf32>
    %cst_61 = arith.constant 5.000000e-01 : f32
    %184 = vector.broadcast %cst_61 : f32 to vector<8x128xf32>
    %185 = arith.mulf %184, %183 : vector<8x128xf32>
    %186 = math.tanh %185 : vector<8x128xf32>
    %cst_62 = arith.constant 1.000000e+00 : f32
    %187 = vector.broadcast %cst_62 : f32 to vector<8x128xf32>
    %188 = arith.addf %186, %187 : vector<8x128xf32>
    %cst_63 = arith.constant 5.000000e-01 : f32
    %189 = vector.broadcast %cst_63 : f32 to vector<8x128xf32>
    %190 = arith.mulf %189, %188 : vector<8x128xf32>
    %191 = vector.extract_strided_slice %182 {offsets = [0, 128], sizes = [8, 128], strides = [1, 1]} : vector<8x512xf32> to vector<8x128xf32>
    %cst_64 = arith.constant 5.000000e-01 : f32
    %192 = vector.broadcast %cst_64 : f32 to vector<8x128xf32>
    %193 = arith.mulf %192, %191 : vector<8x128xf32>
    %194 = math.tanh %193 : vector<8x128xf32>
    %cst_65 = arith.constant 1.000000e+00 : f32
    %195 = vector.broadcast %cst_65 : f32 to vector<8x128xf32>
    %196 = arith.addf %194, %195 : vector<8x128xf32>
    %cst_66 = arith.constant 5.000000e-01 : f32
    %197 = vector.broadcast %cst_66 : f32 to vector<8x128xf32>
    %198 = arith.mulf %197, %196 : vector<8x128xf32>
    %199 = vector.extract_strided_slice %182 {offsets = [0, 256], sizes = [8, 128], strides = [1, 1]} : vector<8x512xf32> to vector<8x128xf32>
    %200 = math.tanh %199 : vector<8x128xf32>
    %201 = vector.extract_strided_slice %182 {offsets = [0, 384], sizes = [8, 128], strides = [1, 1]} : vector<8x512xf32> to vector<8x128xf32>
    %cst_67 = arith.constant 5.000000e-01 : f32
    %202 = vector.broadcast %cst_67 : f32 to vector<8x128xf32>
    %203 = arith.mulf %202, %201 : vector<8x128xf32>
    %204 = math.tanh %203 : vector<8x128xf32>
    %cst_68 = arith.constant 1.000000e+00 : f32
    %205 = vector.broadcast %cst_68 : f32 to vector<8x128xf32>
    %206 = arith.addf %204, %205 : vector<8x128xf32>
    %cst_69 = arith.constant 5.000000e-01 : f32
    %207 = vector.broadcast %cst_69 : f32 to vector<8x128xf32>
    %208 = arith.mulf %207, %206 : vector<8x128xf32>
    %209 = arith.mulf %198, %177 : vector<8x128xf32>
    %210 = arith.mulf %190, %200 : vector<8x128xf32>
    %211 = arith.addf %209, %210 : vector<8x128xf32>
    %212 = math.tanh %211 : vector<8x128xf32>
    %213 = arith.mulf %208, %212 : vector<8x128xf32>
    %214 = vector.extract_strided_slice %6 {offsets = [48, 0], sizes = [8, 512], strides = [1, 1]} : vector<64x512xf32> to vector<8x512xf32>
    %cst_70 = arith.constant dense<0.000000e+00> : vector<8x512xf32>
    %215 = tpu.matmul %213, %7, %cst_70 {dimension_numbers = #tpu.dot_dimension_numbers<[1], [0], [0], [1], [0, 0, 1, 1], [], []>} : vector<8x128xf32>, vector<128x512xf32>, vector<8x512xf32> -> vector<8x512xf32>
    %216 = arith.addf %214, %215 : vector<8x512xf32>
    %217 = vector.extract_strided_slice %216 {offsets = [0, 0], sizes = [8, 128], strides = [1, 1]} : vector<8x512xf32> to vector<8x128xf32>
    %cst_71 = arith.constant 5.000000e-01 : f32
    %218 = vector.broadcast %cst_71 : f32 to vector<8x128xf32>
    %219 = arith.mulf %218, %217 : vector<8x128xf32>
    %220 = math.tanh %219 : vector<8x128xf32>
    %cst_72 = arith.constant 1.000000e+00 : f32
    %221 = vector.broadcast %cst_72 : f32 to vector<8x128xf32>
    %222 = arith.addf %220, %221 : vector<8x128xf32>
    %cst_73 = arith.constant 5.000000e-01 : f32
    %223 = vector.broadcast %cst_73 : f32 to vector<8x128xf32>
    %224 = arith.mulf %223, %222 : vector<8x128xf32>
    %225 = vector.extract_strided_slice %216 {offsets = [0, 128], sizes = [8, 128], strides = [1, 1]} : vector<8x512xf32> to vector<8x128xf32>
    %cst_74 = arith.constant 5.000000e-01 : f32
    %226 = vector.broadcast %cst_74 : f32 to vector<8x128xf32>
    %227 = arith.mulf %226, %225 : vector<8x128xf32>
    %228 = math.tanh %227 : vector<8x128xf32>
    %cst_75 = arith.constant 1.000000e+00 : f32
    %229 = vector.broadcast %cst_75 : f32 to vector<8x128xf32>
    %230 = arith.addf %228, %229 : vector<8x128xf32>
    %cst_76 = arith.constant 5.000000e-01 : f32
    %231 = vector.broadcast %cst_76 : f32 to vector<8x128xf32>
    %232 = arith.mulf %231, %230 : vector<8x128xf32>
    %233 = vector.extract_strided_slice %216 {offsets = [0, 256], sizes = [8, 128], strides = [1, 1]} : vector<8x512xf32> to vector<8x128xf32>
    %234 = math.tanh %233 : vector<8x128xf32>
    %235 = vector.extract_strided_slice %216 {offsets = [0, 384], sizes = [8, 128], strides = [1, 1]} : vector<8x512xf32> to vector<8x128xf32>
    %cst_77 = arith.constant 5.000000e-01 : f32
    %236 = vector.broadcast %cst_77 : f32 to vector<8x128xf32>
    %237 = arith.mulf %236, %235 : vector<8x128xf32>
    %238 = math.tanh %237 : vector<8x128xf32>
    %cst_78 = arith.constant 1.000000e+00 : f32
    %239 = vector.broadcast %cst_78 : f32 to vector<8x128xf32>
    %240 = arith.addf %238, %239 : vector<8x128xf32>
    %cst_79 = arith.constant 5.000000e-01 : f32
    %241 = vector.broadcast %cst_79 : f32 to vector<8x128xf32>
    %242 = arith.mulf %241, %240 : vector<8x128xf32>
    %243 = arith.mulf %232, %211 : vector<8x128xf32>
    %244 = arith.mulf %224, %234 : vector<8x128xf32>
    %245 = arith.addf %243, %244 : vector<8x128xf32>
    %246 = math.tanh %245 : vector<8x128xf32>
    %247 = arith.mulf %242, %246 : vector<8x128xf32>
    %248 = vector.extract_strided_slice %6 {offsets = [56, 0], sizes = [8, 512], strides = [1, 1]} : vector<64x512xf32> to vector<8x512xf32>
    %cst_80 = arith.constant dense<0.000000e+00> : vector<8x512xf32>
    %249 = tpu.matmul %247, %7, %cst_80 {dimension_numbers = #tpu.dot_dimension_numbers<[1], [0], [0], [1], [0, 0, 1, 1], [], []>} : vector<8x128xf32>, vector<128x512xf32>, vector<8x512xf32> -> vector<8x512xf32>
    %250 = arith.addf %248, %249 : vector<8x512xf32>
    %251 = vector.extract_strided_slice %250 {offsets = [0, 0], sizes = [8, 128], strides = [1, 1]} : vector<8x512xf32> to vector<8x128xf32>
    %cst_81 = arith.constant 5.000000e-01 : f32
    %252 = vector.broadcast %cst_81 : f32 to vector<8x128xf32>
    %253 = arith.mulf %252, %251 : vector<8x128xf32>
    %254 = math.tanh %253 : vector<8x128xf32>
    %cst_82 = arith.constant 1.000000e+00 : f32
    %255 = vector.broadcast %cst_82 : f32 to vector<8x128xf32>
    %256 = arith.addf %254, %255 : vector<8x128xf32>
    %cst_83 = arith.constant 5.000000e-01 : f32
    %257 = vector.broadcast %cst_83 : f32 to vector<8x128xf32>
    %258 = arith.mulf %257, %256 : vector<8x128xf32>
    %259 = vector.extract_strided_slice %250 {offsets = [0, 128], sizes = [8, 128], strides = [1, 1]} : vector<8x512xf32> to vector<8x128xf32>
    %cst_84 = arith.constant 5.000000e-01 : f32
    %260 = vector.broadcast %cst_84 : f32 to vector<8x128xf32>
    %261 = arith.mulf %260, %259 : vector<8x128xf32>
    %262 = math.tanh %261 : vector<8x128xf32>
    %cst_85 = arith.constant 1.000000e+00 : f32
    %263 = vector.broadcast %cst_85 : f32 to vector<8x128xf32>
    %264 = arith.addf %262, %263 : vector<8x128xf32>
    %cst_86 = arith.constant 5.000000e-01 : f32
    %265 = vector.broadcast %cst_86 : f32 to vector<8x128xf32>
    %266 = arith.mulf %265, %264 : vector<8x128xf32>
    %267 = vector.extract_strided_slice %250 {offsets = [0, 256], sizes = [8, 128], strides = [1, 1]} : vector<8x512xf32> to vector<8x128xf32>
    %268 = math.tanh %267 : vector<8x128xf32>
    %269 = vector.extract_strided_slice %250 {offsets = [0, 384], sizes = [8, 128], strides = [1, 1]} : vector<8x512xf32> to vector<8x128xf32>
    %cst_87 = arith.constant 5.000000e-01 : f32
    %270 = vector.broadcast %cst_87 : f32 to vector<8x128xf32>
    %271 = arith.mulf %270, %269 : vector<8x128xf32>
    %272 = math.tanh %271 : vector<8x128xf32>
    %cst_88 = arith.constant 1.000000e+00 : f32
    %273 = vector.broadcast %cst_88 : f32 to vector<8x128xf32>
    %274 = arith.addf %272, %273 : vector<8x128xf32>
    %cst_89 = arith.constant 5.000000e-01 : f32
    %275 = vector.broadcast %cst_89 : f32 to vector<8x128xf32>
    %276 = arith.mulf %275, %274 : vector<8x128xf32>
    %277 = arith.mulf %266, %245 : vector<8x128xf32>
    %278 = arith.mulf %258, %268 : vector<8x128xf32>
    %279 = arith.addf %277, %278 : vector<8x128xf32>
    %280 = math.tanh %279 : vector<8x128xf32>
    %281 = arith.mulf %276, %280 : vector<8x128xf32>
    %c0_90 = arith.constant 0 : index
    %c0_91 = arith.constant 0 : index
    %282 = vector.load %arg8[%c0_90, %c0_91] : memref<8x128xf32, #tpu.memory_space<vmem>>, vector<8x128xf32>
    tpu.vector_store %arg8[%c0_90, %c0_91], %281 {strides = array<i32>} : memref<8x128xf32, #tpu.memory_space<vmem>>, vector<8x128xf32>,
    %c0_92 = arith.constant 0 : index
    %c0_93 = arith.constant 0 : index
    %283 = vector.load %arg9[%c0_92, %c0_93] : memref<8x128xf32, #tpu.memory_space<vmem>>, vector<8x128xf32>
    tpu.vector_store %arg9[%c0_92, %c0_93], %279 {strides = array<i32>} : memref<8x128xf32, #tpu.memory_space<vmem>>, vector<8x128xf32>,
    %c0_94 = arith.constant 0 : index
    %c0_95 = arith.constant 0 : index
    %284 = vector.load %arg5[%c0_94, %c0_95] : memref<128x128xf32, #tpu.memory_space<vmem>>, vector<128x128xf32>
    %cst_96 = arith.constant dense<0.000000e+00> : vector<8x128xf32>
    %285 = tpu.matmul %281, %284, %cst_96 {dimension_numbers = #tpu.dot_dimension_numbers<[1], [0], [0], [1], [0, 0, 1, 1], [], []>} : vector<8x128xf32>, vector<128x128xf32>, vector<8x128xf32> -> vector<8x128xf32>
    %c0_97 = arith.constant 0 : index
    %c0_98 = arith.constant 0 : index
    %286 = vector.load %arg6[%c0_97, %c0_98] : memref<1x128xf32, #tpu.memory_space<vmem>>, vector<1x128xf32>
    %287 = vector.broadcast %286 : vector<1x128xf32> to vector<8x128xf32>
    %288 = arith.addf %285, %287 : vector<8x128xf32>
    %cst_99 = arith.constant 5.000000e-01 : f32
    %289 = vector.broadcast %cst_99 : f32 to vector<8x128xf32>
    %290 = arith.mulf %289, %288 : vector<8x128xf32>
    %291 = math.tanh %290 : vector<8x128xf32>
    %cst_100 = arith.constant 1.000000e+00 : f32
    %292 = vector.broadcast %cst_100 : f32 to vector<8x128xf32>
    %293 = arith.addf %291, %292 : vector<8x128xf32>
    %cst_101 = arith.constant 5.000000e-01 : f32
    %294 = vector.broadcast %cst_101 : f32 to vector<8x128xf32>
    %295 = arith.mulf %294, %293 : vector<8x128xf32>
    %c0_102 = arith.constant 0 : index
    %c0_103 = arith.constant 0 : index
    %296 = vector.load %arg7[%c0_102, %c0_103] : memref<8x128xf32, #tpu.memory_space<vmem>>, vector<8x128xf32>
    tpu.vector_store %arg7[%c0_102, %c0_103], %295 {strides = array<i32>} : memref<8x128xf32, #tpu.memory_space<vmem>>, vector<8x128xf32>,
    return
  }
  func.func @transform_0(%arg0: i32) -> (i32, i32, i32) {
    %c0_i32 = arith.constant 0 : i32
    %c0_i32_0 = arith.constant 0 : i32
    %c0_i32_1 = arith.constant 0 : i32
    return %c0_i32, %arg0, %c0_i32_0 : i32, i32, i32
  }
  func.func @transform_1(%arg0: i32) -> (i32, i32) {
    %c0_i32 = arith.constant 0 : i32
    %c0_i32_0 = arith.constant 0 : i32
    %c0_i32_1 = arith.constant 0 : i32
    return %c0_i32, %c0_i32_0 : i32, i32
  }
  func.func @transform_2(%arg0: i32) -> (i32, i32) {
    %c0_i32 = arith.constant 0 : i32
    %c0_i32_0 = arith.constant 0 : i32
    %c0_i32_1 = arith.constant 0 : i32
    return %c0_i32, %c0_i32_0 : i32, i32
  }
  func.func @transform_3(%arg0: i32) -> (i32, i32) {
    %c0_i32 = arith.constant 0 : i32
    %c0_i32_0 = arith.constant 0 : i32
    %c0_i32_1 = arith.constant 0 : i32
    return %c0_i32, %c0_i32_0 : i32, i32
  }
  func.func @transform_4(%arg0: i32) -> (i32, i32) {
    %c0_i32 = arith.constant 0 : i32
    %c0_i32_0 = arith.constant 0 : i32
    %c0_i32_1 = arith.constant 0 : i32
    return %c0_i32, %c0_i32_0 : i32, i32
  }
  func.func @transform_5(%arg0: i32) -> (i32, i32) {
    %c0_i32 = arith.constant 0 : i32
    %c0_i32_0 = arith.constant 0 : i32
    %c0_i32_1 = arith.constant 0 : i32
    return %c0_i32, %c0_i32_0 : i32, i32
  }
  func.func @transform_6(%arg0: i32) -> (i32, i32) {
    %c0_i32 = arith.constant 0 : i32
    %c0_i32_0 = arith.constant 0 : i32
    return %arg0, %c0_i32 : i32, i32
  }
  func.func @transform_7(%arg0: i32) -> (i32, i32) {
    %c0_i32 = arith.constant 0 : i32
    %c0_i32_0 = arith.constant 0 : i32
    return %arg0, %c0_i32 : i32, i32
  }
  func.func @transform_8(%arg0: i32) -> (i32, i32) {
    %c0_i32 = arith.constant 0 : i32
    %c0_i32_0 = arith.constant 0 : i32
    return %arg0, %c0_i32 : i32, i32
  }
}

</mosaic_0001>

<llo_original>
// kernel: tpu_custom_call.1
$region0: #{tpu_custom_call.1}
  #allocation0 [shape = 'u32[]', space=smem, size = 0x4, offset = 0x4, fixed_abs, tag = 'smem constant byte address 0x4 - core index']
  #allocation1 [shape = 'u32[144,128]{1,0:T(1,128)}', space=vmem, size = 0x12000, scoped, tag = 'internal scratch']
  #allocation2 [shape = 'f32[64,512]{1,0:T(8,128)}', space=vmem, size = 0x20000, scoped, tag = 'scratch operand']
  %s0 = inlined_call_operand.hbm [shape: f32[8,8,64], index: 0, kind: input, shape index: {}]
  %s1 = inlined_call_operand.hbm [shape: f32[64,512], index: 1, kind: input, shape index: {}]
  %s2 = inlined_call_operand.hbm [shape: f32[128,512], index: 2, kind: input, shape index: {}]
  %s3 = inlined_call_operand.vmem [shape: f32[1,512], index: 3, kind: input, shape index: {}]
  %s4 = inlined_call_operand.hbm [shape: f32[128,128], index: 4, kind: input, shape index: {}]
  %s5 = inlined_call_operand.vmem [shape: f32[1,128], index: 5, kind: input, shape index: {}]
  %s6 = inlined_call_operand.hbm [shape: f32[8,128], index: 6, kind: output, shape index: {0}]
  %s7 = inlined_call_operand.hbm [shape: f32[8,128], index: 7, kind: output, shape index: {1}]
  %s8 = inlined_call_operand.hbm [shape: f32[8,128], index: 8, kind: output, shape index: {2}]
  %9 = xla_tuple %s6, %s7, %s8
  %s10 = sld [smem:[#allocation0]]
  $region66: #{tpu_custom_call.1} parent=0
    _
  %s12 = ssub.s32 1, %s10
  %s13 = scalar_select 0, %s12, %s10
  $region1: #{tpu_custom_call.1} parent=0
    #allocation3 [shape = 'u8[32768]{0}', space=vmem, size = 0x8000, scoped, tag = 'input window, operand 0, single buffered']
    #allocation4 [shape = 's32[1]{0}', space=sflag, size = 0x4, scoped, tag = 'scoped memory for tpu_custom_call.1']
    #allocation5 [shape = 's32[1]{0}', space=sflag, size = 0x4, scoped, tag = 'scoped memory for tpu_custom_call.1']
    #allocation6 [shape = 'u8[131072]{0}', space=vmem, size = 0x20000, scoped, tag = 'input window, operand 1, single buffered']
    #allocation7 [shape = 's32[1]{0}', space=sflag, size = 0x4, scoped, tag = 'scoped memory for tpu_custom_call.1']
    #allocation8 [shape = 'u8[262144]{0}', space=vmem, size = 0x40000, scoped, tag = 'input window, operand 2, single buffered']
    #allocation9 [shape = 'u8[65536]{0}', space=vmem, size = 0x10000, scoped, tag = 'input window, operand 4, single buffered']
    #allocation10 [shape = 's32[1]{0}', space=sflag, size = 0x4, scoped, tag = 'scoped memory for tpu_custom_call.1']
    #allocation11 [shape = 'u8[4096]{0}', space=vmem, size = 0x1000, scoped, tag = 'output window, operand 0, single buffered']
    #allocation12 [shape = 'u8[4096]{0}', space=vmem, size = 0x1000, scoped, tag = 'output window, operand 1, single buffered']
    #allocation13 [shape = 's32[1]{0}', space=sflag, size = 0x4, scoped, tag = 'scoped memory for tpu_custom_call.1']
    #allocation14 [shape = 'u8[4096]{0}', space=vmem, size = 0x1000, scoped, tag = 'output window, operand 2, single buffered']
    %14 = vsyncpa [#allocation4], 0
    %15 = vsyncpa [#allocation7], 0
    %16 = vsyncpa [#allocation10], 0
    %17 = vsyncpa [#allocation5], 0
    %18 = vsyncpa [#allocation13], 0
    // Predicated region
    $region2: #{tpu_custom_call.1} parent=1 // pred_check
      _
    $region3: #{tpu_custom_call.1} parent=1 // pred_check_branch
      %20 = sbr.rel (0) target = $region5
    $region4: #{tpu_custom_call.1} parent=1 // pred_region
      %s22 = ssub.s32 1024, 1024
      %23 = vsyncadd [#allocation4], %s22
      %s24 = sshll.u32 [#allocation3], 4
      %s25 = int_to_ptr.vmem [resolvable:$true] %s24
      %30 = dma.hbm_to_vmem [thread:$0]  %s0, 1024, %s25, [#allocation4], 128, 128, 8
    $region5: #{tpu_custom_call.1} parent=1 // pred_fallthru
      _
    // Predicated region
    $region6: #{tpu_custom_call.1} parent=1 // pred_check
      _
    $region7: #{tpu_custom_call.1} parent=1 // pred_check_branch
      %32 = sbr.rel (0) target = $region9
    $region8: #{tpu_custom_call.1} parent=1 // pred_region
      %s34 = ssub.s32 4096, 4096
      %35 = vsyncadd [#allocation7], %s34
      %s36 = sshll.u32 [#allocation6], 4
      %s37 = int_to_ptr.vmem [resolvable:$true] %s36
      %42 = dma.hbm_to_vmem [thread:$0]  %s1, 4096, %s37, [#allocation7], 512, 512, 32
    $region9: #{tpu_custom_call.1} parent=1 // pred_fallthru
      _
    // Predicated region
    $region10: #{tpu_custom_call.1} parent=1 // pred_check
      _
    $region11: #{tpu_custom_call.1} parent=1 // pred_check_branch
      %44 = sbr.rel (0) target = $region13
    $region12: #{tpu_custom_call.1} parent=1 // pred_region
      %s46 = ssub.s32 8192, 8192
      %47 = vsyncadd [#allocation7], %s46
      %s48 = sshll.u32 [#allocation8], 4
      %s49 = int_to_ptr.vmem [resolvable:$true] %s48
      %54 = dma.hbm_to_vmem [thread:$0]  %s2, 8192, %s49, [#allocation7], 512, 512, 32
    $region13: #{tpu_custom_call.1} parent=1 // pred_fallthru
      _
    // Predicated region
    $region14: #{tpu_custom_call.1} parent=1 // pred_check
      _
    $region15: #{tpu_custom_call.1} parent=1 // pred_check_branch
      %56 = sbr.rel (0) target = $region17
    $region16: #{tpu_custom_call.1} parent=1 // pred_region
      _
    $region17: #{tpu_custom_call.1} parent=1 // pred_fallthru
      _
    // Predicated region
    $region18: #{tpu_custom_call.1} parent=1 // pred_check
      _
    $region19: #{tpu_custom_call.1} parent=1 // pred_check_branch
      %58 = sbr.rel (0) target = $region21
    $region20: #{tpu_custom_call.1} parent=1 // pred_region
      %s60 = ssub.s32 2048, 2048
      %61 = vsyncadd [#allocation10], %s60
      %s62 = sshll.u32 [#allocation9], 4
      %s63 = int_to_ptr.vmem [resolvable:$true] %s62
      %68 = dma.hbm_to_vmem [thread:$0]  %s4, 2048, %s63, [#allocation10], 128, 128, 8
    $region21: #{tpu_custom_call.1} parent=1 // pred_fallthru
      _
    // Predicated region
    $region22: #{tpu_custom_call.1} parent=1 // pred_check
      _
    $region23: #{tpu_custom_call.1} parent=1 // pred_check_branch
      %70 = sbr.rel (0) target = $region25
    $region24: #{tpu_custom_call.1} parent=1 // pred_region
      _
    $region25: #{tpu_custom_call.1} parent=1 // pred_fallthru
      _
    // Predicated region
    $region26: #{tpu_custom_call.1} parent=1 // pred_check
      _
    $region27: #{tpu_custom_call.1} parent=1 // pred_check_branch
      %72 = sbr.rel (0) target = $region29
    $region28: #{tpu_custom_call.1} parent=1 // pred_region
      %73 = dma.done [#allocation4], 1024
    $region29: #{tpu_custom_call.1} parent=1 // pred_fallthru
      _
    // Predicated region
    $region30: #{tpu_custom_call.1} parent=1 // pred_check
      _
    $region31: #{tpu_custom_call.1} parent=1 // pred_check_branch
      %75 = sbr.rel (0) target = $region33
    $region32: #{tpu_custom_call.1} parent=1 // pred_region
      %76 = dma.done [#allocation7], 4096
    $region33: #{tpu_custom_call.1} parent=1 // pred_fallthru
      _
    // Predicated region
    $region34: #{tpu_custom_call.1} parent=1 // pred_check
      _
    $region35: #{tpu_custom_call.1} parent=1 // pred_check_branch
      %78 = sbr.rel (0) target = $region37
    $region36: #{tpu_custom_call.1} parent=1 // pred_region
      %79 = dma.done [#allocation7], 8192
    $region37: #{tpu_custom_call.1} parent=1 // pred_fallthru
      _
    // Predicated region
    $region38: #{tpu_custom_call.1} parent=1 // pred_check
      _
    $region39: #{tpu_custom_call.1} parent=1 // pred_check_branch
      %81 = sbr.rel (0) target = $region41
    $region40: #{tpu_custom_call.1} parent=1 // pred_region
      %82 = dma.done [#allocation10], 2048
    $region41: #{tpu_custom_call.1} parent=1 // pred_fallthru
      _
    %v83 = vld [vmem:[#allocation3] sm:$0xff]
    %v84 = vld [vmem:[#allocation3 + $0x8] sm:$0xff]
    %v85 = vld [vmem:[#allocation3 + $0x10] sm:$0xff]
    %v86 = vld [vmem:[#allocation3 + $0x18] sm:$0xff]
    %v87 = vld [vmem:[#allocation3 + $0x20] sm:$0xff]
    %v88 = vld [vmem:[#allocation3 + $0x28] sm:$0xff]
    %v89 = vld [vmem:[#allocation3 + $0x30] sm:$0xff]
    %v90 = vld [vmem:[#allocation3 + $0x38] sm:$0xff]
    %v91 = vld [vmem:[#allocation6] sm:$0xff]
    %v92 = vld [vmem:[#allocation6 + $0x8] sm:$0xff]
    %v93 = vld [vmem:[#allocation6 + $0x10] sm:$0xff]
    %v94 = vld [vmem:[#allocation6 + $0x18] sm:$0xff]
    %v95 = vld [vmem:[#allocation6 + $0x20] sm:$0xff]
    %v96 = vld [vmem:[#allocation6 + $0x28] sm:$0xff]
    %v97 = vld [vmem:[#allocation6 + $0x30] sm:$0xff]
    %v98 = vld [vmem:[#allocation6 + $0x38] sm:$0xff]
    %v99 = vld [vmem:[#allocation6 + $0x40] sm:$0xff]
    %v100 = vld [vmem:[#allocation6 + $0x48] sm:$0xff]
    %v101 = vld [vmem:[#allocation6 + $0x50] sm:$0xff]
    %v102 = vld [vmem:[#allocation6 + $0x58] sm:$0xff]
    %v103 = vld [vmem:[#allocation6 + $0x60] sm:$0xff]
    %v104 = vld [vmem:[#allocation6 + $0x68] sm:$0xff]
    %v105 = vld [vmem:[#allocation6 + $0x70] sm:$0xff]
    %v106 = vld [vmem:[#allocation6 + $0x78] sm:$0xff]
    %v107 = vld [vmem:[#allocation6 + $0x80] sm:$0xff]
    %v108 = vld [vmem:[#allocation6 + $0x88] sm:$0xff]
    %v109 = vld [vmem:[#allocation6 + $0x90] sm:$0xff]
    %v110 = vld [vmem:[#allocation6 + $0x98] sm:$0xff]
    %v111 = vld [vmem:[#allocation6 + $0xa0] sm:$0xff]
    %v112 = vld [vmem:[#allocation6 + $0xa8] sm:$0xff]
    %v113 = vld [vmem:[#allocation6 + $0xb0] sm:$0xff]
    %v114 = vld [vmem:[#allocation6 + $0xb8] sm:$0xff]
    %v115 = vld [vmem:[#allocation6 + $0xc0] sm:$0xff]
    %v116 = vld [vmem:[#allocation6 + $0xc8] sm:$0xff]
    %v117 = vld [vmem:[#allocation6 + $0xd0] sm:$0xff]
    %v118 = vld [vmem:[#allocation6 + $0xd8] sm:$0xff]
    %v119 = vld [vmem:[#allocation6 + $0xe0] sm:$0xff]
    %v120 = vld [vmem:[#allocation6 + $0xe8] sm:$0xff]
    %v121 = vld [vmem:[#allocation6 + $0xf0] sm:$0xff]
    %v122 = vld [vmem:[#allocation6 + $0xf8] sm:$0xff]
    %v123 = vld [vmem:[%s3] sm:$0xf]
    %v125 = vlaneseq
    %v126 = vshrl.u32 %v125, 7
    %v127 = vsub.s32 0, %v126
    %v128 = vrot.slane %v123, %v127
    %v129 = vlaneseq
    %v130 = vshrl.u32 %v129, 7
    %v131 = vsub.s32 1, %v130
    %v132 = vrot.slane %v123, %v131
    %v133 = vlaneseq
    %v134 = vshrl.u32 %v133, 7
    %v135 = vsub.s32 2, %v134
    %v136 = vrot.slane %v123, %v135
    %v137 = vlaneseq
    %v138 = vshrl.u32 %v137, 7
    %v139 = vsub.s32 3, %v138
    %v140 = vrot.slane %v123, %v139
    %vm145 = vcmask 523264
    %v147 = vsel %vm145, %v83, 0
    %v150 = vsel %vm145, %v84, 0
    %v153 = vsel %vm145, %v85, 0
    %v156 = vsel %vm145, %v86, 0
    %v159 = vsel %vm145, %v87, 0
    %v162 = vsel %vm145, %v88, 0
    %v165 = vsel %vm145, %v89, 0
    %v168 = vsel %vm145, %v90, 0
    %170 = vmatprep.subr.mxu0 0.0
    %171 = vmatpush1.msra.mxu0 0.0
    %172 = vmatprep.subr.mxu0 0.0
    %173 = vmatpush1.msra.mxu0 0.0
    %174 = vmatprep.subr.mxu0 0.0
    %175 = vmatpush1.msra.mxu0 0.0
    %176 = vmatprep.subr.mxu0 0.0
    %177 = vmatpush1.msra.mxu0 0.0
    %178 = vmatprep.subr.mxu0 0.0
    %179 = vmatpush1.msra.mxu0 0.0
    %180 = vmatprep.subr.mxu0 0.0
    %181 = vmatpush1.msra.mxu0 0.0
    %182 = vmatprep.subr.mxu0 0.0
    %183 = vmatpush1.msra.mxu0 0.0
    %184 = vmatprep.subr.mxu0 0.0
    %185 = vmatpush1.msra.mxu0 0.0
    %186 = vmatprep.subr.mxu0 %v120
    %187 = vmatpush1.msra.mxu0 %v119
    %188 = vmatprep.subr.mxu0 %v116
    %189 = vmatpush1.msra.mxu0 %v115
    %190 = vmatprep.subr.mxu0 %v112
    %191 = vmatpush1.msra.mxu0 %v111
    %192 = vmatprep.subr.mxu0 %v108
    %193 = vmatpush1.msra.mxu0 %v107
    %194 = vmatprep.subr.mxu0 %v104
    %195 = vmatpush1.msra.mxu0 %v103
    %196 = vmatprep.subr.mxu0 %v100
    %197 = vmatpush1.msra.mxu0 %v99
    %198 = vmatprep.subr.mxu0 %v96
    %199 = vmatpush1.msra.mxu0 %v95
    %200 = vmatprep.subr.mxu0 %v92
    %201 = vmatpush1.msra.mxu0 %v91
    %202 = vmatprep.subr.mxu0 0.0
    %203 = vmatpush2.msra.mxu0 0.0
    %204 = vmatprep.subr.mxu0 0.0
    %205 = vmatpush2.msra.mxu0 0.0
    %206 = vmatprep.subr.mxu0 0.0
    %207 = vmatpush2.msra.mxu0 0.0
    %208 = vmatprep.subr.mxu0 0.0
    %209 = vmatpush2.msra.mxu0 0.0
    %210 = vmatprep.subr.mxu0 0.0
    %211 = vmatpush2.msra.mxu0 0.0
    %212 = vmatprep.subr.mxu0 0.0
    %213 = vmatpush2.msra.mxu0 0.0
    %214 = vmatprep.subr.mxu0 0.0
    %215 = vmatpush2.msra.mxu0 0.0
    %216 = vmatprep.subr.mxu0 0.0
    %217 = vmatpush2.msra.mxu0 0.0
    %218 = vmatprep.subr.mxu0 0.0
    %219 = vmatpush2.msra.mxu0 0.0
    %220 = vmatprep.subr.mxu0 0.0
    %221 = vmatpush2.msra.mxu0 0.0
    %222 = vmatprep.subr.mxu0 0.0
    %223 = vmatpush2.msra.mxu0 0.0
    %224 = vmatprep.subr.mxu0 0.0
    %225 = vmatpush2.msra.mxu0 0.0
    %226 = vmatprep.subr.mxu0 0.0
    %227 = vmatpush2.msra.mxu0 0.0
    %228 = vmatprep.subr.mxu0 0.0
    %229 = vmatpush2.msra.mxu0 0.0
    %230 = vmatprep.subr.mxu0 0.0
    %231 = vmatpush2.msra.mxu0 0.0
    %232 = vmatprep.subr.mxu0 0.0
    %233 = vmatpush2.msra.mxu0 0.0
    %234 = vmatprep.mubr.f32.mxu0 0.0
    %235 = vmatmul.mubr.f32.gmra.mxu0 %v147
    %v236 = vpop.f32.mrf.mxu0
    %v237 = vadd.f32 %v128, %v236
    %v238 = vpop.f32.mrf.mxu0
    %v239 = vadd.f32 %v132, %v238
    %240 = vmatprep.mubr.f32.mxu0 0.0
    %241 = vmatmul.mubr.f32.gmra.mxu0 %v150
    %v242 = vpop.f32.mrf.mxu0
    %v243 = vadd.f32 %v128, %v242
    %v244 = vpop.f32.mrf.mxu0
    %v245 = vadd.f32 %v132, %v244
    %246 = vmatprep.mubr.f32.mxu0 0.0
    %247 = vmatmul.mubr.f32.gmra.mxu0 %v153
    %v248 = vpop.f32.mrf.mxu0
    %v249 = vadd.f32 %v128, %v248
    %v250 = vpop.f32.mrf.mxu0
    %v251 = vadd.f32 %v132, %v250
    %252 = vmatprep.mubr.f32.mxu0 0.0
    %253 = vmatmul.mubr.f32.gmra.mxu0 %v156
    %v254 = vpop.f32.mrf.mxu0
    %v255 = vadd.f32 %v128, %v254
    %v256 = vpop.f32.mrf.mxu0
    %v257 = vadd.f32 %v132, %v256
    %258 = vmatprep.mubr.f32.mxu0 0.0
    %259 = vmatmul.mubr.f32.gmra.mxu0 %v159
    %v260 = vpop.f32.mrf.mxu0
    %v261 = vadd.f32 %v128, %v260
    %v262 = vpop.f32.mrf.mxu0
    %v263 = vadd.f32 %v132, %v262
    %264 = vmatprep.mubr.f32.mxu0 0.0
    %265 = vmatmul.mubr.f32.gmra.mxu0 %v162
    %v266 = vpop.f32.mrf.mxu0
    %v267 = vadd.f32 %v128, %v266
    %v268 = vpop.f32.mrf.mxu0
    %v269 = vadd.f32 %v132, %v268
    %270 = vmatprep.mubr.f32.mxu0 0.0
    %271 = vmatmul.mubr.f32.gmra.mxu0 %v165
    %v272 = vpop.f32.mrf.mxu0
    %v273 = vadd.f32 %v128, %v272
    %v274 = vpop.f32.mrf.mxu0
    %v275 = vadd.f32 %v132, %v274
    %276 = vmatprep.mubr.f32.mxu0 0.0
    %277 = vmatmul.mubr.f32.gmra.mxu0 %v168
    %v278 = vpop.f32.mrf.mxu0
    %v279 = vadd.f32 %v128, %v278
    %v280 = vpop.f32.mrf.mxu0
    %v281 = vadd.f32 %v132, %v280
    %282 = vdwg.mxu0
    %283 = vmatprep.subr.mxu0 0.0
    %284 = vmatpush1.msra.mxu0 0.0
    %285 = vmatprep.subr.mxu0 0.0
    %286 = vmatpush1.msra.mxu0 0.0
    %287 = vmatprep.subr.mxu0 0.0
    %288 = vmatpush1.msra.mxu0 0.0
    %289 = vmatprep.subr.mxu0 0.0
    %290 = vmatpush1.msra.mxu0 0.0
    %291 = vmatprep.subr.mxu0 0.0
    %292 = vmatpush1.msra.mxu0 0.0
    %293 = vmatprep.subr.mxu0 0.0
    %294 = vmatpush1.msra.mxu0 0.0
    %295 = vmatprep.subr.mxu0 0.0
    %296 = vmatpush1.msra.mxu0 0.0
    %297 = vmatprep.subr.mxu0 0.0
    %298 = vmatpush1.msra.mxu0 0.0
    %299 = vmatprep.subr.mxu0 %v122
    %300 = vmatpush1.msra.mxu0 %v121
    %301 = vmatprep.subr.mxu0 %v118
    %302 = vmatpush1.msra.mxu0 %v117
    %303 = vmatprep.subr.mxu0 %v114
    %304 = vmatpush1.msra.mxu0 %v113
    %305 = vmatprep.subr.mxu0 %v110
    %306 = vmatpush1.msra.mxu0 %v109
    %307 = vmatprep.subr.mxu0 %v106
    %308 = vmatpush1.msra.mxu0 %v105
    %309 = vmatprep.subr.mxu0 %v102
    %310 = vmatpush1.msra.mxu0 %v101
    %311 = vmatprep.subr.mxu0 %v98
    %312 = vmatpush1.msra.mxu0 %v97
    %313 = vmatprep.subr.mxu0 %v94
    %314 = vmatpush1.msra.mxu0 %v93
    %315 = vmatprep.subr.mxu0 0.0
    %316 = vmatpush2.msra.mxu0 0.0
    %317 = vmatprep.subr.mxu0 0.0
    %318 = vmatpush2.msra.mxu0 0.0
    %319 = vmatprep.subr.mxu0 0.0
    %320 = vmatpush2.msra.mxu0 0.0
    %321 = vmatprep.subr.mxu0 0.0
    %322 = vmatpush2.msra.mxu0 0.0
    %323 = vmatprep.subr.mxu0 0.0
    %324 = vmatpush2.msra.mxu0 0.0
    %325 = vmatprep.subr.mxu0 0.0
    %326 = vmatpush2.msra.mxu0 0.0
    %327 = vmatprep.subr.mxu0 0.0
    %328 = vmatpush2.msra.mxu0 0.0
    %329 = vmatprep.subr.mxu0 0.0
    %330 = vmatpush2.msra.mxu0 0.0
    %331 = vmatprep.subr.mxu0 0.0
    %332 = vmatpush2.msra.mxu0 0.0
    %333 = vmatprep.subr.mxu0 0.0
    %334 = vmatpush2.msra.mxu0 0.0
    %335 = vmatprep.subr.mxu0 0.0
    %336 = vmatpush2.msra.mxu0 0.0
    %337 = vmatprep.subr.mxu0 0.0
    %338 = vmatpush2.msra.mxu0 0.0
    %339 = vmatprep.subr.mxu0 0.0
    %340 = vmatpush2.msra.mxu0 0.0
    %341 = vmatprep.subr.mxu0 0.0
    %342 = vmatpush2.msra.mxu0 0.0
    %343 = vmatprep.subr.mxu0 0.0
    %344 = vmatpush2.msra.mxu0 0.0
    %345 = vmatprep.subr.mxu0 0.0
    %346 = vmatpush2.msra.mxu0 0.0
    %347 = vmatprep.mubr.f32.mxu0 0.0
    %348 = vmatmul.mubr.f32.gmra.mxu0 %v147
    %v349 = vpop.f32.mrf.mxu0
    %v350 = vadd.f32 %v136, %v349
    %v351 = vpop.f32.mrf.mxu0
    %v352 = vadd.f32 %v140, %v351
    %353 = vmatprep.mubr.f32.mxu0 0.0
    %354 = vmatmul.mubr.f32.gmra.mxu0 %v150
    %v355 = vpop.f32.mrf.mxu0
    %v356 = vadd.f32 %v136, %v355
    %v357 = vpop.f32.mrf.mxu0
    %v358 = vadd.f32 %v140, %v357
    %359 = vmatprep.mubr.f32.mxu0 0.0
    %360 = vmatmul.mubr.f32.gmra.mxu0 %v153
    %v361 = vpop.f32.mrf.mxu0
    %v362 = vadd.f32 %v136, %v361
    %v363 = vpop.f32.mrf.mxu0
    %v364 = vadd.f32 %v140, %v363
    %365 = vmatprep.mubr.f32.mxu0 0.0
    %366 = vmatmul.mubr.f32.gmra.mxu0 %v156
    %v367 = vpop.f32.mrf.mxu0
    %v368 = vadd.f32 %v136, %v367
    %v369 = vpop.f32.mrf.mxu0
    %v370 = vadd.f32 %v140, %v369
    %371 = vmatprep.mubr.f32.mxu0 0.0
    %372 = vmatmul.mubr.f32.gmra.mxu0 %v159
    %v373 = vpop.f32.mrf.mxu0
    %v374 = vadd.f32 %v136, %v373
    %v375 = vpop.f32.mrf.mxu0
    %v376 = vadd.f32 %v140, %v375
    %377 = vmatprep.mubr.f32.mxu0 0.0
    %378 = vmatmul.mubr.f32.gmra.mxu0 %v162
    %v379 = vpop.f32.mrf.mxu0
    %v380 = vadd.f32 %v136, %v379
    %v381 = vpop.f32.mrf.mxu0
    %v382 = vadd.f32 %v140, %v381
    %383 = vmatprep.mubr.f32.mxu0 0.0
    %384 = vmatmul.mubr.f32.gmra.mxu0 %v165
    %v385 = vpop.f32.mrf.mxu0
    %v386 = vadd.f32 %v136, %v385
    %v387 = vpop.f32.mrf.mxu0
    %v388 = vadd.f32 %v140, %v387
    %389 = vmatprep.mubr.f32.mxu0 0.0
    %390 = vmatmul.mubr.f32.gmra.mxu0 %v168
    %v391 = vpop.f32.mrf.mxu0
    %v392 = vadd.f32 %v136, %v391
    %v393 = vpop.f32.mrf.mxu0
    %v394 = vadd.f32 %v140, %v393
    %395 = vdwg.mxu0
    %v396 = vld [vmem:[#allocation8] sm:$0xff]
    %v397 = vld [vmem:[#allocation8 + $0x8] sm:$0xff]
    %v398 = vld [vmem:[#allocation8 + $0x10] sm:$0xff]
    %v399 = vld [vmem:[#allocation8 + $0x18] sm:$0xff]
    %v400 = vld [vmem:[#allocation8 + $0x20] sm:$0xff]
    %v401 = vld [vmem:[#allocation8 + $0x28] sm:$0xff]
    %v402 = vld [vmem:[#allocation8 + $0x30] sm:$0xff]
    %v403 = vld [vmem:[#allocation8 + $0x38] sm:$0xff]
    %v404 = vld [vmem:[#allocation8 + $0x40] sm:$0xff]
    %v405 = vld [vmem:[#allocation8 + $0x48] sm:$0xff]
    %v406 = vld [vmem:[#allocation8 + $0x50] sm:$0xff]
    %v407 = vld [vmem:[#allocation8 + $0x58] sm:$0xff]
    %v408 = vld [vmem:[#allocation8 + $0x60] sm:$0xff]
    %v409 = vld [vmem:[#allocation8 + $0x68] sm:$0xff]
    %v410 = vld [vmem:[#allocation8 + $0x70] sm:$0xff]
    %v411 = vld [vmem:[#allocation8 + $0x78] sm:$0xff]
    %v412 = vld [vmem:[#allocation8 + $0x80] sm:$0xff]
    %v413 = vld [vmem:[#allocation8 + $0x88] sm:$0xff]
    %v414 = vld [vmem:[#allocation8 + $0x90] sm:$0xff]
    %v415 = vld [vmem:[#allocation8 + $0x98] sm:$0xff]
    %v416 = vld [vmem:[#allocation8 + $0xa0] sm:$0xff]
    %v417 = vld [vmem:[#allocation8 + $0xa8] sm:$0xff]
    %v418 = vld [vmem:[#allocation8 + $0xb0] sm:$0xff]
    %v419 = vld [vmem:[#allocation8 + $0xb8] sm:$0xff]
    %v420 = vld [vmem:[#allocation8 + $0xc0] sm:$0xff]
    %v421 = vld [vmem:[#allocation8 + $0xc8] sm:$0xff]
    %v422 = vld [vmem:[#allocation8 + $0xd0] sm:$0xff]
    %v423 = vld [vmem:[#allocation8 + $0xd8] sm:$0xff]
    %v424 = vld [vmem:[#allocation8 + $0xe0] sm:$0xff]
    %v425 = vld [vmem:[#allocation8 + $0xe8] sm:$0xff]
    %v426 = vld [vmem:[#allocation8 + $0xf0] sm:$0xff]
    %v427 = vld [vmem:[#allocation8 + $0xf8] sm:$0xff]
    %v428 = vld [vmem:[#allocation8 + $0x100] sm:$0xff]
    %v429 = vld [vmem:[#allocation8 + $0x108] sm:$0xff]
    %v430 = vld [vmem:[#allocation8 + $0x110] sm:$0xff]
    %v431 = vld [vmem:[#allocation8 + $0x118] sm:$0xff]
    %v432 = vld [vmem:[#allocation8 + $0x120] sm:$0xff]
    %v433 = vld [vmem:[#allocation8 + $0x128] sm:$0xff]
    %v434 = vld [vmem:[#allocation8 + $0x130] sm:$0xff]
    %v435 = vld [vmem:[#allocation8 + $0x138] sm:$0xff]
    %v436 = vld [vmem:[#allocation8 + $0x140] sm:$0xff]
    %v437 = vld [vmem:[#allocation8 + $0x148] sm:$0xff]
    %v438 = vld [vmem:[#allocation8 + $0x150] sm:$0xff]
    %v439 = vld [vmem:[#allocation8 + $0x158] sm:$0xff]
    %v440 = vld [vmem:[#allocation8 + $0x160] sm:$0xff]
    %v441 = vld [vmem:[#allocation8 + $0x168] sm:$0xff]
    %v442 = vld [vmem:[#allocation8 + $0x170] sm:$0xff]
    %v443 = vld [vmem:[#allocation8 + $0x178] sm:$0xff]
    %v444 = vld [vmem:[#allocation8 + $0x180] sm:$0xff]
    %v445 = vld [vmem:[#allocation8 + $0x188] sm:$0xff]
    %v446 = vld [vmem:[#allocation8 + $0x190] sm:$0xff]
    %v447 = vld [vmem:[#allocation8 + $0x198] sm:$0xff]
    %v448 = vld [vmem:[#allocation8 + $0x1a0] sm:$0xff]
    %v449 = vld [vmem:[#allocation8 + $0x1a8] sm:$0xff]
    %v450 = vld [vmem:[#allocation8 + $0x1b0] sm:$0xff]
    %v451 = vld [vmem:[#allocation8 + $0x1b8] sm:$0xff]
    %v452 = vld [vmem:[#allocation8 + $0x1c0] sm:$0xff]
    %v453 = vld [vmem:[#allocation8 + $0x1c8] sm:$0xff]
    %v454 = vld [vmem:[#allocation8 + $0x1d0] sm:$0xff]
    %v455 = vld [vmem:[#allocation8 + $0x1d8] sm:$0xff]
    %v456 = vld [vmem:[#allocation8 + $0x1e0] sm:$0xff]
    %v457 = vld [vmem:[#allocation8 + $0x1e8] sm:$0xff]
    %v458 = vld [vmem:[#allocation8 + $0x1f0] sm:$0xff]
    %v459 = vld [vmem:[#allocation8 + $0x1f8] sm:$0xff]
    %460 = vmatprep.subr.mxu0 %v457
    %461 = vmatpush1.msra.mxu0 %v456
    %462 = vmatprep.subr.mxu0 %v453
    %463 = vmatpush1.msra.mxu0 %v452
    %464 = vmatprep.subr.mxu0 %v449
    %465 = vmatpush1.msra.mxu0 %v448
    %466 = vmatprep.subr.mxu0 %v445
    %467 = vmatpush1.msra.mxu0 %v444
    %468 = vmatprep.subr.mxu0 %v441
    %469 = vmatpush1.msra.mxu0 %v440
    %470 = vmatprep.subr.mxu0 %v437
    %471 = vmatpush1.msra.mxu0 %v436
    %472 = vmatprep.subr.mxu0 %v433
    %473 = vmatpush1.msra.mxu0 %v432
    %474 = vmatprep.subr.mxu0 %v429
    %475 = vmatpush1.msra.mxu0 %v428
    %476 = vmatprep.subr.mxu0 %v425
    %477 = vmatpush1.msra.mxu0 %v424
    %478 = vmatprep.subr.mxu0 %v421
    %479 = vmatpush1.msra.mxu0 %v420
    %480 = vmatprep.subr.mxu0 %v417
    %481 = vmatpush1.msra.mxu0 %v416
    %482 = vmatprep.subr.mxu0 %v413
    %483 = vmatpush1.msra.mxu0 %v412
    %484 = vmatprep.subr.mxu0 %v409
    %485 = vmatpush1.msra.mxu0 %v408
    %486 = vmatprep.subr.mxu0 %v405
    %487 = vmatpush1.msra.mxu0 %v404
    %488 = vmatprep.subr.mxu0 %v401
    %489 = vmatpush1.msra.mxu0 %v400
    %490 = vmatprep.subr.mxu0 %v397
    %491 = vmatpush1.msra.mxu0 %v396
    %492 = vmatprep.subr.mxu0 0.0
    %493 = vmatpush2.msra.mxu0 0.0
    %494 = vmatprep.subr.mxu0 0.0
    %495 = vmatpush2.msra.mxu0 0.0
    %496 = vmatprep.subr.mxu0 0.0
    %497 = vmatpush2.msra.mxu0 0.0
    %498 = vmatprep.subr.mxu0 0.0
    %499 = vmatpush2.msra.mxu0 0.0
    %500 = vmatprep.subr.mxu0 0.0
    %501 = vmatpush2.msra.mxu0 0.0
    %502 = vmatprep.subr.mxu0 0.0
    %503 = vmatpush2.msra.mxu0 0.0
    %504 = vmatprep.subr.mxu0 0.0
    %505 = vmatpush2.msra.mxu0 0.0
    %506 = vmatprep.subr.mxu0 0.0
    %507 = vmatpush2.msra.mxu0 0.0
    %508 = vmatprep.subr.mxu0 0.0
    %509 = vmatpush2.msra.mxu0 0.0
    %510 = vmatprep.subr.mxu0 0.0
    %511 = vmatpush2.msra.mxu0 0.0
    %512 = vmatprep.subr.mxu0 0.0
    %513 = vmatpush2.msra.mxu0 0.0
    %514 = vmatprep.subr.mxu0 0.0
    %515 = vmatpush2.msra.mxu0 0.0
    %516 = vmatprep.subr.mxu0 0.0
    %517 = vmatpush2.msra.mxu0 0.0
    %518 = vmatprep.subr.mxu0 0.0
    %519 = vmatpush2.msra.mxu0 0.0
    %520 = vmatprep.subr.mxu0 0.0
    %521 = vmatpush2.msra.mxu0 0.0
    %522 = vmatprep.subr.mxu0 0.0
    %523 = vmatpush2.msra.mxu0 0.0
    %524 = vmatprep.mubr.f32.mxu0 0.0
    %525 = vmatmul.mubr.f32.gmra.mxu0 0.0
    %v526 = vpop.f32.mrf.mxu0
    %v527 = vadd.f32 0.0, %v526
    %v528 = vpop.f32.mrf.mxu0
    %v529 = vadd.f32 0.0, %v528
    %530 = vdwg.mxu0
    %531 = vmatprep.subr.mxu0 %v459
    %532 = vmatpush1.msra.mxu0 %v458
    %533 = vmatprep.subr.mxu0 %v455
    %534 = vmatpush1.msra.mxu0 %v454
    %535 = vmatprep.subr.mxu0 %v451
    %536 = vmatpush1.msra.mxu0 %v450
    %537 = vmatprep.subr.mxu0 %v447
    %538 = vmatpush1.msra.mxu0 %v446
    %539 = vmatprep.subr.mxu0 %v443
    %540 = vmatpush1.msra.mxu0 %v442
    %541 = vmatprep.subr.mxu0 %v439
    %542 = vmatpush1.msra.mxu0 %v438
    %543 = vmatprep.subr.mxu0 %v435
    %544 = vmatpush1.msra.mxu0 %v434
    %545 = vmatprep.subr.mxu0 %v431
    %546 = vmatpush1.msra.mxu0 %v430
    %547 = vmatprep.subr.mxu0 %v427
    %548 = vmatpush1.msra.mxu0 %v426
    %549 = vmatprep.subr.mxu0 %v423
    %550 = vmatpush1.msra.mxu0 %v422
    %551 = vmatprep.subr.mxu0 %v419
    %552 = vmatpush1.msra.mxu0 %v418
    %553 = vmatprep.subr.mxu0 %v415
    %554 = vmatpush1.msra.mxu0 %v414
    %555 = vmatprep.subr.mxu0 %v411
    %556 = vmatpush1.msra.mxu0 %v410
    %557 = vmatprep.subr.mxu0 %v407
    %558 = vmatpush1.msra.mxu0 %v406
    %559 = vmatprep.subr.mxu0 %v403
    %560 = vmatpush1.msra.mxu0 %v402
    %561 = vmatprep.subr.mxu0 %v399
    %562 = vmatpush1.msra.mxu0 %v398
    %563 = vmatprep.subr.mxu0 0.0
    %564 = vmatpush2.msra.mxu0 0.0
    %565 = vmatprep.subr.mxu0 0.0
    %566 = vmatpush2.msra.mxu0 0.0
    %567 = vmatprep.subr.mxu0 0.0
    %568 = vmatpush2.msra.mxu0 0.0
    %569 = vmatprep.subr.mxu0 0.0
    %570 = vmatpush2.msra.mxu0 0.0
    %571 = vmatprep.subr.mxu0 0.0
    %572 = vmatpush2.msra.mxu0 0.0
    %573 = vmatprep.subr.mxu0 0.0
    %574 = vmatpush2.msra.mxu0 0.0
    %575 = vmatprep.subr.mxu0 0.0
    %576 = vmatpush2.msra.mxu0 0.0
    %577 = vmatprep.subr.mxu0 0.0
    %578 = vmatpush2.msra.mxu0 0.0
    %579 = vmatprep.subr.mxu0 0.0
    %580 = vmatpush2.msra.mxu0 0.0
    %581 = vmatprep.subr.mxu0 0.0
    %582 = vmatpush2.msra.mxu0 0.0
    %583 = vmatprep.subr.mxu0 0.0
    %584 = vmatpush2.msra.mxu0 0.0
    %585 = vmatprep.subr.mxu0 0.0
    %586 = vmatpush2.msra.mxu0 0.0
    %587 = vmatprep.subr.mxu0 0.0
    %588 = vmatpush2.msra.mxu0 0.0
    %589 = vmatprep.subr.mxu0 0.0
    %590 = vmatpush2.msra.mxu0 0.0
    %591 = vmatprep.subr.mxu0 0.0
    %592 = vmatpush2.msra.mxu0 0.0
    %593 = vmatprep.subr.mxu0 0.0
    %594 = vmatpush2.msra.mxu0 0.0
    %595 = vmatprep.mubr.f32.mxu0 0.0
    %596 = vmatmul.mubr.f32.gmra.mxu0 0.0
    %v597 = vpop.f32.mrf.mxu0
    %v598 = vadd.f32 0.0, %v597
    %v599 = vpop.f32.mrf.mxu0
    %v600 = vadd.f32 0.0, %v599
    %601 = vdwg.mxu0
    %v602 = vadd.f32 %v237, %v527
    %v603 = vadd.f32 %v239, %v529
    %v604 = vadd.f32 %v350, %v598
    %v605 = vadd.f32 %v352, %v600
    %v606 = vmul.f32 %v602, 0.5
    %v607 = vtanh.pop %v606
    %v608 = vadd.f32 %v607, 1.0
    %v609 = vmul.f32 %v608, 0.5
    %v610 = vmul.f32 %v603, 0.5
    %v611 = vtanh.pop %v610
    %v612 = vadd.f32 %v611, 1.0
    %v613 = vmul.f32 %v612, 0.5
    %v614 = vtanh.pop %v604
    %v615 = vmul.f32 %v605, 0.5
    %v616 = vtanh.pop %v615
    %v617 = vadd.f32 %v616, 1.0
    %v618 = vmul.f32 %v617, 0.5
    %v619 = vmul.f32 %v613, 0.0
    %v620 = vmul.f32 %v609, %v614
    %v621 = vadd.f32 %v619, %v620
    %v622 = vtanh.pop %v621
    %v623 = vmul.f32 %v618, %v622
    %624 = vmatprep.subr.mxu0 %v457
    %625 = vmatpush1.msra.mxu0 %v456
    %626 = vmatprep.subr.mxu0 %v453
    %627 = vmatpush1.msra.mxu0 %v452
    %628 = vmatprep.subr.mxu0 %v449
    %629 = vmatpush1.msra.mxu0 %v448
    %630 = vmatprep.subr.mxu0 %v445
    %631 = vmatpush1.msra.mxu0 %v444
    %632 = vmatprep.subr.mxu0 %v441
    %633 = vmatpush1.msra.mxu0 %v440
    %634 = vmatprep.subr.mxu0 %v437
    %635 = vmatpush1.msra.mxu0 %v436
    %636 = vmatprep.subr.mxu0 %v433
    %637 = vmatpush1.msra.mxu0 %v432
    %638 = vmatprep.subr.mxu0 %v429
    %639 = vmatpush1.msra.mxu0 %v428
    %640 = vmatprep.subr.mxu0 %v425
    %641 = vmatpush1.msra.mxu0 %v424
    %642 = vmatprep.subr.mxu0 %v421
    %643 = vmatpush1.msra.mxu0 %v420
    %644 = vmatprep.subr.mxu0 %v417
    %645 = vmatpush1.msra.mxu0 %v416
    %646 = vmatprep.subr.mxu0 %v413
    %647 = vmatpush1.msra.mxu0 %v412
    %648 = vmatprep.subr.mxu0 %v409
    %649 = vmatpush1.msra.mxu0 %v408
    %650 = vmatprep.subr.mxu0 %v405
    %651 = vmatpush1.msra.mxu0 %v404
    %652 = vmatprep.subr.mxu0 %v401
    %653 = vmatpush1.msra.mxu0 %v400
    %654 = vmatprep.subr.mxu0 %v397
    %655 = vmatpush1.msra.mxu0 %v396
    %656 = vmatprep.subr.mxu0 0.0
    %657 = vmatpush2.msra.mxu0 0.0
    %658 = vmatprep.subr.mxu0 0.0
    %659 = vmatpush2.msra.mxu0 0.0
    %660 = vmatprep.subr.mxu0 0.0
    %661 = vmatpush2.msra.mxu0 0.0
    %662 = vmatprep.subr.mxu0 0.0
    %663 = vmatpush2.msra.mxu0 0.0
    %664 = vmatprep.subr.mxu0 0.0
    %665 = vmatpush2.msra.mxu0 0.0
    %666 = vmatprep.subr.mxu0 0.0
    %667 = vmatpush2.msra.mxu0 0.0
    %668 = vmatprep.subr.mxu0 0.0
    %669 = vmatpush2.msra.mxu0 0.0
    %670 = vmatprep.subr.mxu0 0.0
    %671 = vmatpush2.msra.mxu0 0.0
    %672 = vmatprep.subr.mxu0 0.0
    %673 = vmatpush2.msra.mxu0 0.0
    %674 = vmatprep.subr.mxu0 0.0
    %675 = vmatpush2.msra.mxu0 0.0
    %676 = vmatprep.subr.mxu0 0.0
    %677 = vmatpush2.msra.mxu0 0.0
    %678 = vmatprep.subr.mxu0 0.0
    %679 = vmatpush2.msra.mxu0 0.0
    %680 = vmatprep.subr.mxu0 0.0
    %681 = vmatpush2.msra.mxu0 0.0
    %682 = vmatprep.subr.mxu0 0.0
    %683 = vmatpush2.msra.mxu0 0.0
    %684 = vmatprep.subr.mxu0 0.0
    %685 = vmatpush2.msra.mxu0 0.0
    %686 = vmatprep.subr.mxu0 0.0
    %687 = vmatpush2.msra.mxu0 0.0
    %688 = vmatprep.mubr.f32.mxu0 0.0
    %689 = vmatmul.mubr.f32.gmra.mxu0 %v623
    %v690 = vpop.f32.mrf.mxu0
    %v691 = vadd.f32 0.0, %v690
    %v692 = vpop.f32.mrf.mxu0
    %v693 = vadd.f32 0.0, %v692
    %694 = vdwg.mxu0
    %695 = vmatprep.subr.mxu0 %v459
    %696 = vmatpush1.msra.mxu0 %v458
    %697 = vmatprep.subr.mxu0 %v455
    %698 = vmatpush1.msra.mxu0 %v454
    %699 = vmatprep.subr.mxu0 %v451
    %700 = vmatpush1.msra.mxu0 %v450
    %701 = vmatprep.subr.mxu0 %v447
    %702 = vmatpush1.msra.mxu0 %v446
    %703 = vmatprep.subr.mxu0 %v443
    %704 = vmatpush1.msra.mxu0 %v442
    %705 = vmatprep.subr.mxu0 %v439
    %706 = vmatpush1.msra.mxu0 %v438
    %707 = vmatprep.subr.mxu0 %v435
    %708 = vmatpush1.msra.mxu0 %v434
    %709 = vmatprep.subr.mxu0 %v431
    %710 = vmatpush1.msra.mxu0 %v430
    %711 = vmatprep.subr.mxu0 %v427
    %712 = vmatpush1.msra.mxu0 %v426
    %713 = vmatprep.subr.mxu0 %v423
    %714 = vmatpush1.msra.mxu0 %v422
    %715 = vmatprep.subr.mxu0 %v419
    %716 = vmatpush1.msra.mxu0 %v418
    %717 = vmatprep.subr.mxu0 %v415
    %718 = vmatpush1.msra.mxu0 %v414
    %719 = vmatprep.subr.mxu0 %v411
    %720 = vmatpush1.msra.mxu0 %v410
    %721 = vmatprep.subr.mxu0 %v407
    %722 = vmatpush1.msra.mxu0 %v406
    %723 = vmatprep.subr.mxu0 %v403
    %724 = vmatpush1.msra.mxu0 %v402
    %725 = vmatprep.subr.mxu0 %v399
    %726 = vmatpush1.msra.mxu0 %v398
    %727 = vmatprep.subr.mxu0 0.0
    %728 = vmatpush2.msra.mxu0 0.0
    %729 = vmatprep.subr.mxu0 0.0
    %730 = vmatpush2.msra.mxu0 0.0
    %731 = vmatprep.subr.mxu0 0.0
    %732 = vmatpush2.msra.mxu0 0.0
    %733 = vmatprep.subr.mxu0 0.0
    %734 = vmatpush2.msra.mxu0 0.0
    %735 = vmatprep.subr.mxu0 0.0
    %736 = vmatpush2.msra.mxu0 0.0
    %737 = vmatprep.subr.mxu0 0.0
    %738 = vmatpush2.msra.mxu0 0.0
    %739 = vmatprep.subr.mxu0 0.0
    %740 = vmatpush2.msra.mxu0 0.0
    %741 = vmatprep.subr.mxu0 0.0
    %742 = vmatpush2.msra.mxu0 0.0
    %743 = vmatprep.subr.mxu0 0.0
    %744 = vmatpush2.msra.mxu0 0.0
    %745 = vmatprep.subr.mxu0 0.0
    %746 = vmatpush2.msra.mxu0 0.0
    %747 = vmatprep.subr.mxu0 0.0
    %748 = vmatpush2.msra.mxu0 0.0
    %749 = vmatprep.subr.mxu0 0.0
    %750 = vmatpush2.msra.mxu0 0.0
    %751 = vmatprep.subr.mxu0 0.0
    %752 = vmatpush2.msra.mxu0 0.0
    %753 = vmatprep.subr.mxu0 0.0
    %754 = vmatpush2.msra.mxu0 0.0
    %755 = vmatprep.subr.mxu0 0.0
    %756 = vmatpush2.msra.mxu0 0.0
    %757 = vmatprep.subr.mxu0 0.0
    %758 = vmatpush2.msra.mxu0 0.0
    %759 = vmatprep.mubr.f32.mxu0 0.0
    %760 = vmatmul.mubr.f32.gmra.mxu0 %v623
    %v761 = vpop.f32.mrf.mxu0
    %v762 = vadd.f32 0.0, %v761
    %v763 = vpop.f32.mrf.mxu0
    %v764 = vadd.f32 0.0, %v763
    %765 = vdwg.mxu0
    %v766 = vadd.f32 %v243, %v691
    %v767 = vadd.f32 %v245, %v693
    %v768 = vadd.f32 %v356, %v762
    %v769 = vadd.f32 %v358, %v764
    %v770 = vmul.f32 %v766, 0.5
    %v771 = vtanh.pop %v770
    %v772 = vadd.f32 %v771, 1.0
    %v773 = vmul.f32 %v772, 0.5
    %v774 = vmul.f32 %v767, 0.5
    %v775 = vtanh.pop %v774
    %v776 = vadd.f32 %v775, 1.0
    %v777 = vmul.f32 %v776, 0.5
    %v778 = vtanh.pop %v768
    %v779 = vmul.f32 %v769, 0.5
    %v780 = vtanh.pop %v779
    %v781 = vadd.f32 %v780, 1.0
    %v782 = vmul.f32 %v781, 0.5
    %v783 = vmul.f32 %v777, %v621
    %v784 = vmul.f32 %v773, %v778
    %v785 = vadd.f32 %v783, %v784
    %v786 = vtanh.pop %v785
    %v787 = vmul.f32 %v782, %v786
    %788 = vmatprep.subr.mxu0 %v457
    %789 = vmatpush1.msra.mxu0 %v456
    %790 = vmatprep.subr.mxu0 %v453
    %791 = vmatpush1.msra.mxu0 %v452
    %792 = vmatprep.subr.mxu0 %v449
    %793 = vmatpush1.msra.mxu0 %v448
    %794 = vmatprep.subr.mxu0 %v445
    %795 = vmatpush1.msra.mxu0 %v444
    %796 = vmatprep.subr.mxu0 %v441
    %797 = vmatpush1.msra.mxu0 %v440
    %798 = vmatprep.subr.mxu0 %v437
    %799 = vmatpush1.msra.mxu0 %v436
    %800 = vmatprep.subr.mxu0 %v433
    %801 = vmatpush1.msra.mxu0 %v432
    %802 = vmatprep.subr.mxu0 %v429
    %803 = vmatpush1.msra.mxu0 %v428
    %804 = vmatprep.subr.mxu0 %v425
    %805 = vmatpush1.msra.mxu0 %v424
    %806 = vmatprep.subr.mxu0 %v421
    %807 = vmatpush1.msra.mxu0 %v420
    %808 = vmatprep.subr.mxu0 %v417
    %809 = vmatpush1.msra.mxu0 %v416
    %810 = vmatprep.subr.mxu0 %v413
    %811 = vmatpush1.msra.mxu0 %v412
    %812 = vmatprep.subr.mxu0 %v409
    %813 = vmatpush1.msra.mxu0 %v408
    %814 = vmatprep.subr.mxu0 %v405
    %815 = vmatpush1.msra.mxu0 %v404
    %816 = vmatprep.subr.mxu0 %v401
    %817 = vmatpush1.msra.mxu0 %v400
    %818 = vmatprep.subr.mxu0 %v397
    %819 = vmatpush1.msra.mxu0 %v396
    %820 = vmatprep.subr.mxu0 0.0
    %821 = vmatpush2.msra.mxu0 0.0
    %822 = vmatprep.subr.mxu0 0.0
    %823 = vmatpush2.msra.mxu0 0.0
    %824 = vmatprep.subr.mxu0 0.0
    %825 = vmatpush2.msra.mxu0 0.0
    %826 = vmatprep.subr.mxu0 0.0
    %827 = vmatpush2.msra.mxu0 0.0
    %828 = vmatprep.subr.mxu0 0.0
    %829 = vmatpush2.msra.mxu0 0.0
    %830 = vmatprep.subr.mxu0 0.0
    %831 = vmatpush2.msra.mxu0 0.0
    %832 = vmatprep.subr.mxu0 0.0
    %833 = vmatpush2.msra.mxu0 0.0
    %834 = vmatprep.subr.mxu0 0.0
    %835 = vmatpush2.msra.mxu0 0.0
    %836 = vmatprep.subr.mxu0 0.0
    %837 = vmatpush2.msra.mxu0 0.0
    %838 = vmatprep.subr.mxu0 0.0
    %839 = vmatpush2.msra.mxu0 0.0
    %840 = vmatprep.subr.mxu0 0.0
    %841 = vmatpush2.msra.mxu0 0.0
    %842 = vmatprep.subr.mxu0 0.0
    %843 = vmatpush2.msra.mxu0 0.0
    %844 = vmatprep.subr.mxu0 0.0
    %845 = vmatpush2.msra.mxu0 0.0
    %846 = vmatprep.subr.mxu0 0.0
    %847 = vmatpush2.msra.mxu0 0.0
    %848 = vmatprep.subr.mxu0 0.0
    %849 = vmatpush2.msra.mxu0 0.0
    %850 = vmatprep.subr.mxu0 0.0
    %851 = vmatpush2.msra.mxu0 0.0
    %852 = vmatprep.mubr.f32.mxu0 0.0
    %853 = vmatmul.mubr.f32.gmra.mxu0 %v787
    %v854 = vpop.f32.mrf.mxu0
    %v855 = vadd.f32 0.0, %v854
    %v856 = vpop.f32.mrf.mxu0
    %v857 = vadd.f32 0.0, %v856
    %858 = vdwg.mxu0
    %859 = vmatprep.subr.mxu0 %v459
    %860 = vmatpush1.msra.mxu0 %v458
    %861 = vmatprep.subr.mxu0 %v455
    %862 = vmatpush1.msra.mxu0 %v454
    %863 = vmatprep.subr.mxu0 %v451
    %864 = vmatpush1.msra.mxu0 %v450
    %865 = vmatprep.subr.mxu0 %v447
    %866 = vmatpush1.msra.mxu0 %v446
    %867 = vmatprep.subr.mxu0 %v443
    %868 = vmatpush1.msra.mxu0 %v442
    %869 = vmatprep.subr.mxu0 %v439
    %870 = vmatpush1.msra.mxu0 %v438
    %871 = vmatprep.subr.mxu0 %v435
    %872 = vmatpush1.msra.mxu0 %v434
    %873 = vmatprep.subr.mxu0 %v431
    %874 = vmatpush1.msra.mxu0 %v430
    %875 = vmatprep.subr.mxu0 %v427
    %876 = vmatpush1.msra.mxu0 %v426
    %877 = vmatprep.subr.mxu0 %v423
    %878 = vmatpush1.msra.mxu0 %v422
    %879 = vmatprep.subr.mxu0 %v419
    %880 = vmatpush1.msra.mxu0 %v418
    %881 = vmatprep.subr.mxu0 %v415
    %882 = vmatpush1.msra.mxu0 %v414
    %883 = vmatprep.subr.mxu0 %v411
    %884 = vmatpush1.msra.mxu0 %v410
    %885 = vmatprep.subr.mxu0 %v407
    %886 = vmatpush1.msra.mxu0 %v406
    %887 = vmatprep.subr.mxu0 %v403
    %888 = vmatpush1.msra.mxu0 %v402
    %889 = vmatprep.subr.mxu0 %v399
    %890 = vmatpush1.msra.mxu0 %v398
    %891 = vmatprep.subr.mxu0 0.0
    %892 = vmatpush2.msra.mxu0 0.0
    %893 = vmatprep.subr.mxu0 0.0
    %894 = vmatpush2.msra.mxu0 0.0
    %895 = vmatprep.subr.mxu0 0.0
    %896 = vmatpush2.msra.mxu0 0.0
    %897 = vmatprep.subr.mxu0 0.0
    %898 = vmatpush2.msra.mxu0 0.0
    %899 = vmatprep.subr.mxu0 0.0
    %900 = vmatpush2.msra.mxu0 0.0
    %901 = vmatprep.subr.mxu0 0.0
    %902 = vmatpush2.msra.mxu0 0.0
    %903 = vmatprep.subr.mxu0 0.0
    %904 = vmatpush2.msra.mxu0 0.0
    %905 = vmatprep.subr.mxu0 0.0
    %906 = vmatpush2.msra.mxu0 0.0
    %907 = vmatprep.subr.mxu0 0.0
    %908 = vmatpush2.msra.mxu0 0.0
    %909 = vmatprep.subr.mxu0 0.0
    %910 = vmatpush2.msra.mxu0 0.0
    %911 = vmatprep.subr.mxu0 0.0
    %912 = vmatpush2.msra.mxu0 0.0
    %913 = vmatprep.subr.mxu0 0.0
    %914 = vmatpush2.msra.mxu0 0.0
    %915 = vmatprep.subr.mxu0 0.0
    %916 = vmatpush2.msra.mxu0 0.0
    %917 = vmatprep.subr.mxu0 0.0
    %918 = vmatpush2.msra.mxu0 0.0
    %919 = vmatprep.subr.mxu0 0.0
    %920 = vmatpush2.msra.mxu0 0.0
    %921 = vmatprep.subr.mxu0 0.0
    %922 = vmatpush2.msra.mxu0 0.0
    %923 = vmatprep.mubr.f32.mxu0 0.0
    %924 = vmatmul.mubr.f32.gmra.mxu0 %v787
    %v925 = vpop.f32.mrf.mxu0
    %v926 = vadd.f32 0.0, %v925
    %v927 = vpop.f32.mrf.mxu0
    %v928 = vadd.f32 0.0, %v927
    %929 = vdwg.mxu0
    %v930 = vadd.f32 %v249, %v855
    %v931 = vadd.f32 %v251, %v857
    %v932 = vadd.f32 %v362, %v926
    %v933 = vadd.f32 %v364, %v928
    %v934 = vmul.f32 %v930, 0.5
    %v935 = vtanh.pop %v934
    %v936 = vadd.f32 %v935, 1.0
    %v937 = vmul.f32 %v936, 0.5
    %v938 = vmul.f32 %v931, 0.5
    %v939 = vtanh.pop %v938
    %v940 = vadd.f32 %v939, 1.0
    %v941 = vmul.f32 %v940, 0.5
    %v942 = vtanh.pop %v932
    %v943 = vmul.f32 %v933, 0.5
    %v944 = vtanh.pop %v943
    %v945 = vadd.f32 %v944, 1.0
    %v946 = vmul.f32 %v945, 0.5
    %v947 = vmul.f32 %v941, %v785
    %v948 = vmul.f32 %v937, %v942
    %v949 = vadd.f32 %v947, %v948
    %v950 = vtanh.pop %v949
    %v951 = vmul.f32 %v946, %v950
    %952 = vmatprep.subr.mxu0 %v457
    %953 = vmatpush1.msra.mxu0 %v456
    %954 = vmatprep.subr.mxu0 %v453
    %955 = vmatpush1.msra.mxu0 %v452
    %956 = vmatprep.subr.mxu0 %v449
    %957 = vmatpush1.msra.mxu0 %v448
    %958 = vmatprep.subr.mxu0 %v445
    %959 = vmatpush1.msra.mxu0 %v444
    %960 = vmatprep.subr.mxu0 %v441
    %961 = vmatpush1.msra.mxu0 %v440
    %962 = vmatprep.subr.mxu0 %v437
    %963 = vmatpush1.msra.mxu0 %v436
    %964 = vmatprep.subr.mxu0 %v433
    %965 = vmatpush1.msra.mxu0 %v432
    %966 = vmatprep.subr.mxu0 %v429
    %967 = vmatpush1.msra.mxu0 %v428
    %968 = vmatprep.subr.mxu0 %v425
    %969 = vmatpush1.msra.mxu0 %v424
    %970 = vmatprep.subr.mxu0 %v421
    %971 = vmatpush1.msra.mxu0 %v420
    %972 = vmatprep.subr.mxu0 %v417
    %973 = vmatpush1.msra.mxu0 %v416
    %974 = vmatprep.subr.mxu0 %v413
    %975 = vmatpush1.msra.mxu0 %v412
    %976 = vmatprep.subr.mxu0 %v409
    %977 = vmatpush1.msra.mxu0 %v408
    %978 = vmatprep.subr.mxu0 %v405
    %979 = vmatpush1.msra.mxu0 %v404
    %980 = vmatprep.subr.mxu0 %v401
    %981 = vmatpush1.msra.mxu0 %v400
    %982 = vmatprep.subr.mxu0 %v397
    %983 = vmatpush1.msra.mxu0 %v396
    %984 = vmatprep.subr.mxu0 0.0
    %985 = vmatpush2.msra.mxu0 0.0
    %986 = vmatprep.subr.mxu0 0.0
    %987 = vmatpush2.msra.mxu0 0.0
    %988 = vmatprep.subr.mxu0 0.0
    %989 = vmatpush2.msra.mxu0 0.0
    %990 = vmatprep.subr.mxu0 0.0
    %991 = vmatpush2.msra.mxu0 0.0
    %992 = vmatprep.subr.mxu0 0.0
    %993 = vmatpush2.msra.mxu0 0.0
    %994 = vmatprep.subr.mxu0 0.0
    %995 = vmatpush2.msra.mxu0 0.0
    %996 = vmatprep.subr.mxu0 0.0
    %997 = vmatpush2.msra.mxu0 0.0
    %998 = vmatprep.subr.mxu0 0.0
    %999 = vmatpush2.msra.mxu0 0.0
    %1000 = vmatprep.subr.mxu0 0.0
    %1001 = vmatpush2.msra.mxu0 0.0
    %1002 = vmatprep.subr.mxu0 0.0
    %1003 = vmatpush2.msra.mxu0 0.0
    %1004 = vmatprep.subr.mxu0 0.0
    %1005 = vmatpush2.msra.mxu0 0.0
    %1006 = vmatprep.subr.mxu0 0.0
    %1007 = vmatpush2.msra.mxu0 0.0
    %1008 = vmatprep.subr.mxu0 0.0
    %1009 = vmatpush2.msra.mxu0 0.0
    %1010 = vmatprep.subr.mxu0 0.0
    %1011 = vmatpush2.msra.mxu0 0.0
    %1012 = vmatprep.subr.mxu0 0.0
    %1013 = vmatpush2.msra.mxu0 0.0
    %1014 = vmatprep.subr.mxu0 0.0
    %1015 = vmatpush2.msra.mxu0 0.0
    %1016 = vmatprep.mubr.f32.mxu0 0.0
    %1017 = vmatmul.mubr.f32.gmra.mxu0 %v951
    %v1018 = vpop.f32.mrf.mxu0
    %v1019 = vadd.f32 0.0, %v1018
    %v1020 = vpop.f32.mrf.mxu0
    %v1021 = vadd.f32 0.0, %v1020
    %1022 = vdwg.mxu0
    %1023 = vmatprep.subr.mxu0 %v459
    %1024 = vmatpush1.msra.mxu0 %v458
    %1025 = vmatprep.subr.mxu0 %v455
    %1026 = vmatpush1.msra.mxu0 %v454
    %1027 = vmatprep.subr.mxu0 %v451
    %1028 = vmatpush1.msra.mxu0 %v450
    %1029 = vmatprep.subr.mxu0 %v447
    %1030 = vmatpush1.msra.mxu0 %v446
    %1031 = vmatprep.subr.mxu0 %v443
    %1032 = vmatpush1.msra.mxu0 %v442
    %1033 = vmatprep.subr.mxu0 %v439
    %1034 = vmatpush1.msra.mxu0 %v438
    %1035 = vmatprep.subr.mxu0 %v435
    %1036 = vmatpush1.msra.mxu0 %v434
    %1037 = vmatprep.subr.mxu0 %v431
    %1038 = vmatpush1.msra.mxu0 %v430
    %1039 = vmatprep.subr.mxu0 %v427
    %1040 = vmatpush1.msra.mxu0 %v426
    %1041 = vmatprep.subr.mxu0 %v423
    %1042 = vmatpush1.msra.mxu0 %v422
    %1043 = vmatprep.subr.mxu0 %v419
    %1044 = vmatpush1.msra.mxu0 %v418
    %1045 = vmatprep.subr.mxu0 %v415
    %1046 = vmatpush1.msra.mxu0 %v414
    %1047 = vmatprep.subr.mxu0 %v411
    %1048 = vmatpush1.msra.mxu0 %v410
    %1049 = vmatprep.subr.mxu0 %v407
    %1050 = vmatpush1.msra.mxu0 %v406
    %1051 = vmatprep.subr.mxu0 %v403
    %1052 = vmatpush1.msra.mxu0 %v402
    %1053 = vmatprep.subr.mxu0 %v399
    %1054 = vmatpush1.msra.mxu0 %v398
    %1055 = vmatprep.subr.mxu0 0.0
    %1056 = vmatpush2.msra.mxu0 0.0
    %1057 = vmatprep.subr.mxu0 0.0
    %1058 = vmatpush2.msra.mxu0 0.0
    %1059 = vmatprep.subr.mxu0 0.0
    %1060 = vmatpush2.msra.mxu0 0.0
    %1061 = vmatprep.subr.mxu0 0.0
    %1062 = vmatpush2.msra.mxu0 0.0
    %1063 = vmatprep.subr.mxu0 0.0
    %1064 = vmatpush2.msra.mxu0 0.0
    %1065 = vmatprep.subr.mxu0 0.0
    %1066 = vmatpush2.msra.mxu0 0.0
    %1067 = vmatprep.subr.mxu0 0.0
    %1068 = vmatpush2.msra.mxu0 0.0
    %1069 = vmatprep.subr.mxu0 0.0
    %1070 = vmatpush2.msra.mxu0 0.0
    %1071 = vmatprep.subr.mxu0 0.0
    %1072 = vmatpush2.msra.mxu0 0.0
    %1073 = vmatprep.subr.mxu0 0.0
    %1074 = vmatpush2.msra.mxu0 0.0
    %1075 = vmatprep.subr.mxu0 0.0
    %1076 = vmatpush2.msra.mxu0 0.0
    %1077 = vmatprep.subr.mxu0 0.0
    %1078 = vmatpush2.msra.mxu0 0.0
    %1079 = vmatprep.subr.mxu0 0.0
    %1080 = vmatpush2.msra.mxu0 0.0
    %1081 = vmatprep.subr.mxu0 0.0
    %1082 = vmatpush2.msra.mxu0 0.0
    %1083 = vmatprep.subr.mxu0 0.0
    %1084 = vmatpush2.msra.mxu0 0.0
    %1085 = vmatprep.subr.mxu0 0.0
    %1086 = vmatpush2.msra.mxu0 0.0
    %1087 = vmatprep.mubr.f32.mxu0 0.0
    %1088 = vmatmul.mubr.f32.gmra.mxu0 %v951
    %v1089 = vpop.f32.mrf.mxu0
    %v1090 = vadd.f32 0.0, %v1089
    %v1091 = vpop.f32.mrf.mxu0
    %v1092 = vadd.f32 0.0, %v1091
    %1093 = vdwg.mxu0
    %v1094 = vadd.f32 %v255, %v1019
    %v1095 = vadd.f32 %v257, %v1021
    %v1096 = vadd.f32 %v368, %v1090
    %v1097 = vadd.f32 %v370, %v1092
    %v1098 = vmul.f32 %v1094, 0.5
    %v1099 = vtanh.pop %v1098
    %v1100 = vadd.f32 %v1099, 1.0
    %v1101 = vmul.f32 %v1100, 0.5
    %v1102 = vmul.f32 %v1095, 0.5
    %v1103 = vtanh.pop %v1102
    %v1104 = vadd.f32 %v1103, 1.0
    %v1105 = vmul.f32 %v1104, 0.5
    %v1106 = vtanh.pop %v1096
    %v1107 = vmul.f32 %v1097, 0.5
    %v1108 = vtanh.pop %v1107
    %v1109 = vadd.f32 %v1108, 1.0
    %v1110 = vmul.f32 %v1109, 0.5
    %v1111 = vmul.f32 %v1105, %v949
    %v1112 = vmul.f32 %v1101, %v1106
    %v1113 = vadd.f32 %v1111, %v1112
    %v1114 = vtanh.pop %v1113
    %v1115 = vmul.f32 %v1110, %v1114
    %1116 = vmatprep.subr.mxu0 %v457
    %1117 = vmatpush1.msra.mxu0 %v456
    %1118 = vmatprep.subr.mxu0 %v453
    %1119 = vmatpush1.msra.mxu0 %v452
    %1120 = vmatprep.subr.mxu0 %v449
    %1121 = vmatpush1.msra.mxu0 %v448
    %1122 = vmatprep.subr.mxu0 %v445
    %1123 = vmatpush1.msra.mxu0 %v444
    %1124 = vmatprep.subr.mxu0 %v441
    %1125 = vmatpush1.msra.mxu0 %v440
    %1126 = vmatprep.subr.mxu0 %v437
    %1127 = vmatpush1.msra.mxu0 %v436
    %1128 = vmatprep.subr.mxu0 %v433
    %1129 = vmatpush1.msra.mxu0 %v432
    %1130 = vmatprep.subr.mxu0 %v429
    %1131 = vmatpush1.msra.mxu0 %v428
    %1132 = vmatprep.subr.mxu0 %v425
    %1133 = vmatpush1.msra.mxu0 %v424
    %1134 = vmatprep.subr.mxu0 %v421
    %1135 = vmatpush1.msra.mxu0 %v420
    %1136 = vmatprep.subr.mxu0 %v417
    %1137 = vmatpush1.msra.mxu0 %v416
    %1138 = vmatprep.subr.mxu0 %v413
    %1139 = vmatpush1.msra.mxu0 %v412
    %1140 = vmatprep.subr.mxu0 %v409
    %1141 = vmatpush1.msra.mxu0 %v408
    %1142 = vmatprep.subr.mxu0 %v405
    %1143 = vmatpush1.msra.mxu0 %v404
    %1144 = vmatprep.subr.mxu0 %v401
    %1145 = vmatpush1.msra.mxu0 %v400
    %1146 = vmatprep.subr.mxu0 %v397
    %1147 = vmatpush1.msra.mxu0 %v396
    %1148 = vmatprep.subr.mxu0 0.0
    %1149 = vmatpush2.msra.mxu0 0.0
    %1150 = vmatprep.subr.mxu0 0.0
    %1151 = vmatpush2.msra.mxu0 0.0
    %1152 = vmatprep.subr.mxu0 0.0
    %1153 = vmatpush2.msra.mxu0 0.0
    %1154 = vmatprep.subr.mxu0 0.0
    %1155 = vmatpush2.msra.mxu0 0.0
    %1156 = vmatprep.subr.mxu0 0.0
    %1157 = vmatpush2.msra.mxu0 0.0
    %1158 = vmatprep.subr.mxu0 0.0
    %1159 = vmatpush2.msra.mxu0 0.0
    %1160 = vmatprep.subr.mxu0 0.0
    %1161 = vmatpush2.msra.mxu0 0.0
    %1162 = vmatprep.subr.mxu0 0.0
    %1163 = vmatpush2.msra.mxu0 0.0
    %1164 = vmatprep.subr.mxu0 0.0
    %1165 = vmatpush2.msra.mxu0 0.0
    %1166 = vmatprep.subr.mxu0 0.0
    %1167 = vmatpush2.msra.mxu0 0.0
    %1168 = vmatprep.subr.mxu0 0.0
    %1169 = vmatpush2.msra.mxu0 0.0
    %1170 = vmatprep.subr.mxu0 0.0
    %1171 = vmatpush2.msra.mxu0 0.0
    %1172 = vmatprep.subr.mxu0 0.0
    %1173 = vmatpush2.msra.mxu0 0.0
    %1174 = vmatprep.subr.mxu0 0.0
    %1175 = vmatpush2.msra.mxu0 0.0
    %1176 = vmatprep.subr.mxu0 0.0
    %1177 = vmatpush2.msra.mxu0 0.0
    %1178 = vmatprep.subr.mxu0 0.0
    %1179 = vmatpush2.msra.mxu0 0.0
    %1180 = vmatprep.mubr.f32.mxu0 0.0
    %1181 = vmatmul.mubr.f32.gmra.mxu0 %v1115
    %v1182 = vpop.f32.mrf.mxu0
    %v1183 = vadd.f32 0.0, %v1182
    %v1184 = vpop.f32.mrf.mxu0
    %v1185 = vadd.f32 0.0, %v1184
    %1186 = vdwg.mxu0
    %1187 = vmatprep.subr.mxu0 %v459
    %1188 = vmatpush1.msra.mxu0 %v458
    %1189 = vmatprep.subr.mxu0 %v455
    %1190 = vmatpush1.msra.mxu0 %v454
    %1191 = vmatprep.subr.mxu0 %v451
    %1192 = vmatpush1.msra.mxu0 %v450
    %1193 = vmatprep.subr.mxu0 %v447
    %1194 = vmatpush1.msra.mxu0 %v446
    %1195 = vmatprep.subr.mxu0 %v443
    %1196 = vmatpush1.msra.mxu0 %v442
    %1197 = vmatprep.subr.mxu0 %v439
    %1198 = vmatpush1.msra.mxu0 %v438
    %1199 = vmatprep.subr.mxu0 %v435
    %1200 = vmatpush1.msra.mxu0 %v434
    %1201 = vmatprep.subr.mxu0 %v431
    %1202 = vmatpush1.msra.mxu0 %v430
    %1203 = vmatprep.subr.mxu0 %v427
    %1204 = vmatpush1.msra.mxu0 %v426
    %1205 = vmatprep.subr.mxu0 %v423
    %1206 = vmatpush1.msra.mxu0 %v422
    %1207 = vmatprep.subr.mxu0 %v419
    %1208 = vmatpush1.msra.mxu0 %v418
    %1209 = vmatprep.subr.mxu0 %v415
    %1210 = vmatpush1.msra.mxu0 %v414
    %1211 = vmatprep.subr.mxu0 %v411
    %1212 = vmatpush1.msra.mxu0 %v410
    %1213 = vmatprep.subr.mxu0 %v407
    %1214 = vmatpush1.msra.mxu0 %v406
    %1215 = vmatprep.subr.mxu0 %v403
    %1216 = vmatpush1.msra.mxu0 %v402
    %1217 = vmatprep.subr.mxu0 %v399
    %1218 = vmatpush1.msra.mxu0 %v398
    %1219 = vmatprep.subr.mxu0 0.0
    %1220 = vmatpush2.msra.mxu0 0.0
    %1221 = vmatprep.subr.mxu0 0.0
    %1222 = vmatpush2.msra.mxu0 0.0
    %1223 = vmatprep.subr.mxu0 0.0
    %1224 = vmatpush2.msra.mxu0 0.0
    %1225 = vmatprep.subr.mxu0 0.0
    %1226 = vmatpush2.msra.mxu0 0.0
    %1227 = vmatprep.subr.mxu0 0.0
    %1228 = vmatpush2.msra.mxu0 0.0
    %1229 = vmatprep.subr.mxu0 0.0
    %1230 = vmatpush2.msra.mxu0 0.0
    %1231 = vmatprep.subr.mxu0 0.0
    %1232 = vmatpush2.msra.mxu0 0.0
    %1233 = vmatprep.subr.mxu0 0.0
    %1234 = vmatpush2.msra.mxu0 0.0
    %1235 = vmatprep.subr.mxu0 0.0
    %1236 = vmatpush2.msra.mxu0 0.0
    %1237 = vmatprep.subr.mxu0 0.0
    %1238 = vmatpush2.msra.mxu0 0.0
    %1239 = vmatprep.subr.mxu0 0.0
    %1240 = vmatpush2.msra.mxu0 0.0
    %1241 = vmatprep.subr.mxu0 0.0
    %1242 = vmatpush2.msra.mxu0 0.0
    %1243 = vmatprep.subr.mxu0 0.0
    %1244 = vmatpush2.msra.mxu0 0.0
    %1245 = vmatprep.subr.mxu0 0.0
    %1246 = vmatpush2.msra.mxu0 0.0
    %1247 = vmatprep.subr.mxu0 0.0
    %1248 = vmatpush2.msra.mxu0 0.0
    %1249 = vmatprep.subr.mxu0 0.0
    %1250 = vmatpush2.msra.mxu0 0.0
    %1251 = vmatprep.mubr.f32.mxu0 0.0
    %1252 = vmatmul.mubr.f32.gmra.mxu0 %v1115
    %v1253 = vpop.f32.mrf.mxu0
    %v1254 = vadd.f32 0.0, %v1253
    %v1255 = vpop.f32.mrf.mxu0
    %v1256 = vadd.f32 0.0, %v1255
    %1257 = vdwg.mxu0
    %v1258 = vadd.f32 %v261, %v1183
    %v1259 = vadd.f32 %v263, %v1185
    %v1260 = vadd.f32 %v374, %v1254
    %v1261 = vadd.f32 %v376, %v1256
    %v1262 = vmul.f32 %v1258, 0.5
    %v1263 = vtanh.pop %v1262
    %v1264 = vadd.f32 %v1263, 1.0
    %v1265 = vmul.f32 %v1264, 0.5
    %v1266 = vmul.f32 %v1259, 0.5
    %v1267 = vtanh.pop %v1266
    %v1268 = vadd.f32 %v1267, 1.0
    %v1269 = vmul.f32 %v1268, 0.5
    %v1270 = vtanh.pop %v1260
    %v1271 = vmul.f32 %v1261, 0.5
    %v1272 = vtanh.pop %v1271
    %v1273 = vadd.f32 %v1272, 1.0
    %v1274 = vmul.f32 %v1273, 0.5
    %v1275 = vmul.f32 %v1269, %v1113
    %v1276 = vmul.f32 %v1265, %v1270
    %v1277 = vadd.f32 %v1275, %v1276
    %v1278 = vtanh.pop %v1277
    %v1279 = vmul.f32 %v1274, %v1278
    %1280 = vmatprep.subr.mxu0 %v457
    %1281 = vmatpush1.msra.mxu0 %v456
    %1282 = vmatprep.subr.mxu0 %v453
    %1283 = vmatpush1.msra.mxu0 %v452
    %1284 = vmatprep.subr.mxu0 %v449
    %1285 = vmatpush1.msra.mxu0 %v448
    %1286 = vmatprep.subr.mxu0 %v445
    %1287 = vmatpush1.msra.mxu0 %v444
    %1288 = vmatprep.subr.mxu0 %v441
    %1289 = vmatpush1.msra.mxu0 %v440
    %1290 = vmatprep.subr.mxu0 %v437
    %1291 = vmatpush1.msra.mxu0 %v436
    %1292 = vmatprep.subr.mxu0 %v433
    %1293 = vmatpush1.msra.mxu0 %v432
    %1294 = vmatprep.subr.mxu0 %v429
    %1295 = vmatpush1.msra.mxu0 %v428
    %1296 = vmatprep.subr.mxu0 %v425
    %1297 = vmatpush1.msra.mxu0 %v424
    %1298 = vmatprep.subr.mxu0 %v421
    %1299 = vmatpush1.msra.mxu0 %v420
    %1300 = vmatprep.subr.mxu0 %v417
    %1301 = vmatpush1.msra.mxu0 %v416
    %1302 = vmatprep.subr.mxu0 %v413
    %1303 = vmatpush1.msra.mxu0 %v412
    %1304 = vmatprep.subr.mxu0 %v409
    %1305 = vmatpush1.msra.mxu0 %v408
    %1306 = vmatprep.subr.mxu0 %v405
    %1307 = vmatpush1.msra.mxu0 %v404
    %1308 = vmatprep.subr.mxu0 %v401
    %1309 = vmatpush1.msra.mxu0 %v400
    %1310 = vmatprep.subr.mxu0 %v397
    %1311 = vmatpush1.msra.mxu0 %v396
    %1312 = vmatprep.subr.mxu0 0.0
    %1313 = vmatpush2.msra.mxu0 0.0
    %1314 = vmatprep.subr.mxu0 0.0
    %1315 = vmatpush2.msra.mxu0 0.0
    %1316 = vmatprep.subr.mxu0 0.0
    %1317 = vmatpush2.msra.mxu0 0.0
    %1318 = vmatprep.subr.mxu0 0.0
    %1319 = vmatpush2.msra.mxu0 0.0
    %1320 = vmatprep.subr.mxu0 0.0
    %1321 = vmatpush2.msra.mxu0 0.0
    %1322 = vmatprep.subr.mxu0 0.0
    %1323 = vmatpush2.msra.mxu0 0.0
    %1324 = vmatprep.subr.mxu0 0.0
    %1325 = vmatpush2.msra.mxu0 0.0
    %1326 = vmatprep.subr.mxu0 0.0
    %1327 = vmatpush2.msra.mxu0 0.0
    %1328 = vmatprep.subr.mxu0 0.0
    %1329 = vmatpush2.msra.mxu0 0.0
    %1330 = vmatprep.subr.mxu0 0.0
    %1331 = vmatpush2.msra.mxu0 0.0
    %1332 = vmatprep.subr.mxu0 0.0
    %1333 = vmatpush2.msra.mxu0 0.0
    %1334 = vmatprep.subr.mxu0 0.0
    %1335 = vmatpush2.msra.mxu0 0.0
    %1336 = vmatprep.subr.mxu0 0.0
    %1337 = vmatpush2.msra.mxu0 0.0
    %1338 = vmatprep.subr.mxu0 0.0
    %1339 = vmatpush2.msra.mxu0 0.0
    %1340 = vmatprep.subr.mxu0 0.0
    %1341 = vmatpush2.msra.mxu0 0.0
    %1342 = vmatprep.subr.mxu0 0.0
    %1343 = vmatpush2.msra.mxu0 0.0
    %1344 = vmatprep.mubr.f32.mxu0 0.0
    %1345 = vmatmul.mubr.f32.gmra.mxu0 %v1279
    %v1346 = vpop.f32.mrf.mxu0
    %v1347 = vadd.f32 0.0, %v1346
    %v1348 = vpop.f32.mrf.mxu0
    %v1349 = vadd.f32 0.0, %v1348
    %1350 = vdwg.mxu0
    %1351 = vmatprep.subr.mxu0 %v459
    %1352 = vmatpush1.msra.mxu0 %v458
    %1353 = vmatprep.subr.mxu0 %v455
    %1354 = vmatpush1.msra.mxu0 %v454
    %1355 = vmatprep.subr.mxu0 %v451
    %1356 = vmatpush1.msra.mxu0 %v450
    %1357 = vmatprep.subr.mxu0 %v447
    %1358 = vmatpush1.msra.mxu0 %v446
    %1359 = vmatprep.subr.mxu0 %v443
    %1360 = vmatpush1.msra.mxu0 %v442
    %1361 = vmatprep.subr.mxu0 %v439
    %1362 = vmatpush1.msra.mxu0 %v438
    %1363 = vmatprep.subr.mxu0 %v435
    %1364 = vmatpush1.msra.mxu0 %v434
    %1365 = vmatprep.subr.mxu0 %v431
    %1366 = vmatpush1.msra.mxu0 %v430
    %1367 = vmatprep.subr.mxu0 %v427
    %1368 = vmatpush1.msra.mxu0 %v426
    %1369 = vmatprep.subr.mxu0 %v423
    %1370 = vmatpush1.msra.mxu0 %v422
    %1371 = vmatprep.subr.mxu0 %v419
    %1372 = vmatpush1.msra.mxu0 %v418
    %1373 = vmatprep.subr.mxu0 %v415
    %1374 = vmatpush1.msra.mxu0 %v414
    %1375 = vmatprep.subr.mxu0 %v411
    %1376 = vmatpush1.msra.mxu0 %v410
    %1377 = vmatprep.subr.mxu0 %v407
    %1378 = vmatpush1.msra.mxu0 %v406
    %1379 = vmatprep.subr.mxu0 %v403
    %1380 = vmatpush1.msra.mxu0 %v402
    %1381 = vmatprep.subr.mxu0 %v399
    %1382 = vmatpush1.msra.mxu0 %v398
    %1383 = vmatprep.subr.mxu0 0.0
    %1384 = vmatpush2.msra.mxu0 0.0
    %1385 = vmatprep.subr.mxu0 0.0
    %1386 = vmatpush2.msra.mxu0 0.0
    %1387 = vmatprep.subr.mxu0 0.0
    %1388 = vmatpush2.msra.mxu0 0.0
    %1389 = vmatprep.subr.mxu0 0.0
    %1390 = vmatpush2.msra.mxu0 0.0
    %1391 = vmatprep.subr.mxu0 0.0
    %1392 = vmatpush2.msra.mxu0 0.0
    %1393 = vmatprep.subr.mxu0 0.0
    %1394 = vmatpush2.msra.mxu0 0.0
    %1395 = vmatprep.subr.mxu0 0.0
    %1396 = vmatpush2.msra.mxu0 0.0
    %1397 = vmatprep.subr.mxu0 0.0
    %1398 = vmatpush2.msra.mxu0 0.0
    %1399 = vmatprep.subr.mxu0 0.0
    %1400 = vmatpush2.msra.mxu0 0.0
    %1401 = vmatprep.subr.mxu0 0.0
    %1402 = vmatpush2.msra.mxu0 0.0
    %1403 = vmatprep.subr.mxu0 0.0
    %1404 = vmatpush2.msra.mxu0 0.0
    %1405 = vmatprep.subr.mxu0 0.0
    %1406 = vmatpush2.msra.mxu0 0.0
    %1407 = vmatprep.subr.mxu0 0.0
    %1408 = vmatpush2.msra.mxu0 0.0
    %1409 = vmatprep.subr.mxu0 0.0
    %1410 = vmatpush2.msra.mxu0 0.0
    %1411 = vmatprep.subr.mxu0 0.0
    %1412 = vmatpush2.msra.mxu0 0.0
    %1413 = vmatprep.subr.mxu0 0.0
    %1414 = vmatpush2.msra.mxu0 0.0
    %1415 = vmatprep.mubr.f32.mxu0 0.0
    %1416 = vmatmul.mubr.f32.gmra.mxu0 %v1279
    %v1417 = vpop.f32.mrf.mxu0
    %v1418 = vadd.f32 0.0, %v1417
    %v1419 = vpop.f32.mrf.mxu0
    %v1420 = vadd.f32 0.0, %v1419
    %1421 = vdwg.mxu0
    %v1422 = vadd.f32 %v267, %v1347
    %v1423 = vadd.f32 %v269, %v1349
    %v1424 = vadd.f32 %v380, %v1418
    %v1425 = vadd.f32 %v382, %v1420
    %v1426 = vmul.f32 %v1422, 0.5
    %v1427 = vtanh.pop %v1426
    %v1428 = vadd.f32 %v1427, 1.0
    %v1429 = vmul.f32 %v1428, 0.5
    %v1430 = vmul.f32 %v1423, 0.5
    %v1431 = vtanh.pop %v1430
    %v1432 = vadd.f32 %v1431, 1.0
    %v1433 = vmul.f32 %v1432, 0.5
    %v1434 = vtanh.pop %v1424
    %v1435 = vmul.f32 %v1425, 0.5
    %v1436 = vtanh.pop %v1435
    %v1437 = vadd.f32 %v1436, 1.0
    %v1438 = vmul.f32 %v1437, 0.5
    %v1439 = vmul.f32 %v1433, %v1277
    %v1440 = vmul.f32 %v1429, %v1434
    %v1441 = vadd.f32 %v1439, %v1440
    %v1442 = vtanh.pop %v1441
    %v1443 = vmul.f32 %v1438, %v1442
    %1444 = vmatprep.subr.mxu0 %v457
    %1445 = vmatpush1.msra.mxu0 %v456
    %1446 = vmatprep.subr.mxu0 %v453
    %1447 = vmatpush1.msra.mxu0 %v452
    %1448 = vmatprep.subr.mxu0 %v449
    %1449 = vmatpush1.msra.mxu0 %v448
    %1450 = vmatprep.subr.mxu0 %v445
    %1451 = vmatpush1.msra.mxu0 %v444
    %1452 = vmatprep.subr.mxu0 %v441
    %1453 = vmatpush1.msra.mxu0 %v440
    %1454 = vmatprep.subr.mxu0 %v437
    %1455 = vmatpush1.msra.mxu0 %v436
    %1456 = vmatprep.subr.mxu0 %v433
    %1457 = vmatpush1.msra.mxu0 %v432
    %1458 = vmatprep.subr.mxu0 %v429
    %1459 = vmatpush1.msra.mxu0 %v428
    %1460 = vmatprep.subr.mxu0 %v425
    %1461 = vmatpush1.msra.mxu0 %v424
    %1462 = vmatprep.subr.mxu0 %v421
    %1463 = vmatpush1.msra.mxu0 %v420
    %1464 = vmatprep.subr.mxu0 %v417
    %1465 = vmatpush1.msra.mxu0 %v416
    %1466 = vmatprep.subr.mxu0 %v413
    %1467 = vmatpush1.msra.mxu0 %v412
    %1468 = vmatprep.subr.mxu0 %v409
    %1469 = vmatpush1.msra.mxu0 %v408
    %1470 = vmatprep.subr.mxu0 %v405
    %1471 = vmatpush1.msra.mxu0 %v404
    %1472 = vmatprep.subr.mxu0 %v401
    %1473 = vmatpush1.msra.mxu0 %v400
    %1474 = vmatprep.subr.mxu0 %v397
    %1475 = vmatpush1.msra.mxu0 %v396
    %1476 = vmatprep.subr.mxu0 0.0
    %1477 = vmatpush2.msra.mxu0 0.0
    %1478 = vmatprep.subr.mxu0 0.0
    %1479 = vmatpush2.msra.mxu0 0.0
    %1480 = vmatprep.subr.mxu0 0.0
    %1481 = vmatpush2.msra.mxu0 0.0
    %1482 = vmatprep.subr.mxu0 0.0
    %1483 = vmatpush2.msra.mxu0 0.0
    %1484 = vmatprep.subr.mxu0 0.0
    %1485 = vmatpush2.msra.mxu0 0.0
    %1486 = vmatprep.subr.mxu0 0.0
    %1487 = vmatpush2.msra.mxu0 0.0
    %1488 = vmatprep.subr.mxu0 0.0
    %1489 = vmatpush2.msra.mxu0 0.0
    %1490 = vmatprep.subr.mxu0 0.0
    %1491 = vmatpush2.msra.mxu0 0.0
    %1492 = vmatprep.subr.mxu0 0.0
    %1493 = vmatpush2.msra.mxu0 0.0
    %1494 = vmatprep.subr.mxu0 0.0
    %1495 = vmatpush2.msra.mxu0 0.0
    %1496 = vmatprep.subr.mxu0 0.0
    %1497 = vmatpush2.msra.mxu0 0.0
    %1498 = vmatprep.subr.mxu0 0.0
    %1499 = vmatpush2.msra.mxu0 0.0
    %1500 = vmatprep.subr.mxu0 0.0
    %1501 = vmatpush2.msra.mxu0 0.0
    %1502 = vmatprep.subr.mxu0 0.0
    %1503 = vmatpush2.msra.mxu0 0.0
    %1504 = vmatprep.subr.mxu0 0.0
    %1505 = vmatpush2.msra.mxu0 0.0
    %1506 = vmatprep.subr.mxu0 0.0
    %1507 = vmatpush2.msra.mxu0 0.0
    %1508 = vmatprep.mubr.f32.mxu0 0.0
    %1509 = vmatmul.mubr.f32.gmra.mxu0 %v1443
    %v1510 = vpop.f32.mrf.mxu0
    %v1511 = vadd.f32 0.0, %v1510
    %v1512 = vpop.f32.mrf.mxu0
    %v1513 = vadd.f32 0.0, %v1512
    %1514 = vdwg.mxu0
    %1515 = vmatprep.subr.mxu0 %v459
    %1516 = vmatpush1.msra.mxu0 %v458
    %1517 = vmatprep.subr.mxu0 %v455
    %1518 = vmatpush1.msra.mxu0 %v454
    %1519 = vmatprep.subr.mxu0 %v451
    %1520 = vmatpush1.msra.mxu0 %v450
    %1521 = vmatprep.subr.mxu0 %v447
    %1522 = vmatpush1.msra.mxu0 %v446
    %1523 = vmatprep.subr.mxu0 %v443
    %1524 = vmatpush1.msra.mxu0 %v442
    %1525 = vmatprep.subr.mxu0 %v439
    %1526 = vmatpush1.msra.mxu0 %v438
    %1527 = vmatprep.subr.mxu0 %v435
    %1528 = vmatpush1.msra.mxu0 %v434
    %1529 = vmatprep.subr.mxu0 %v431
    %1530 = vmatpush1.msra.mxu0 %v430
    %1531 = vmatprep.subr.mxu0 %v427
    %1532 = vmatpush1.msra.mxu0 %v426
    %1533 = vmatprep.subr.mxu0 %v423
    %1534 = vmatpush1.msra.mxu0 %v422
    %1535 = vmatprep.subr.mxu0 %v419
    %1536 = vmatpush1.msra.mxu0 %v418
    %1537 = vmatprep.subr.mxu0 %v415
    %1538 = vmatpush1.msra.mxu0 %v414
    %1539 = vmatprep.subr.mxu0 %v411
    %1540 = vmatpush1.msra.mxu0 %v410
    %1541 = vmatprep.subr.mxu0 %v407
    %1542 = vmatpush1.msra.mxu0 %v406
    %1543 = vmatprep.subr.mxu0 %v403
    %1544 = vmatpush1.msra.mxu0 %v402
    %1545 = vmatprep.subr.mxu0 %v399
    %1546 = vmatpush1.msra.mxu0 %v398
    %1547 = vmatprep.subr.mxu0 0.0
    %1548 = vmatpush2.msra.mxu0 0.0
    %1549 = vmatprep.subr.mxu0 0.0
    %1550 = vmatpush2.msra.mxu0 0.0
    %1551 = vmatprep.subr.mxu0 0.0
    %1552 = vmatpush2.msra.mxu0 0.0
    %1553 = vmatprep.subr.mxu0 0.0
    %1554 = vmatpush2.msra.mxu0 0.0
    %1555 = vmatprep.subr.mxu0 0.0
    %1556 = vmatpush2.msra.mxu0 0.0
    %1557 = vmatprep.subr.mxu0 0.0
    %1558 = vmatpush2.msra.mxu0 0.0
    %1559 = vmatprep.subr.mxu0 0.0
    %1560 = vmatpush2.msra.mxu0 0.0
    %1561 = vmatprep.subr.mxu0 0.0
    %1562 = vmatpush2.msra.mxu0 0.0
    %1563 = vmatprep.subr.mxu0 0.0
    %1564 = vmatpush2.msra.mxu0 0.0
    %1565 = vmatprep.subr.mxu0 0.0
    %1566 = vmatpush2.msra.mxu0 0.0
    %1567 = vmatprep.subr.mxu0 0.0
    %1568 = vmatpush2.msra.mxu0 0.0
    %1569 = vmatprep.subr.mxu0 0.0
    %1570 = vmatpush2.msra.mxu0 0.0
    %1571 = vmatprep.subr.mxu0 0.0
    %1572 = vmatpush2.msra.mxu0 0.0
    %1573 = vmatprep.subr.mxu0 0.0
    %1574 = vmatpush2.msra.mxu0 0.0
    %1575 = vmatprep.subr.mxu0 0.0
    %1576 = vmatpush2.msra.mxu0 0.0
    %1577 = vmatprep.subr.mxu0 0.0
    %1578 = vmatpush2.msra.mxu0 0.0
    %1579 = vmatprep.mubr.f32.mxu0 0.0
    %1580 = vmatmul.mubr.f32.gmra.mxu0 %v1443
    %v1581 = vpop.f32.mrf.mxu0
    %v1582 = vadd.f32 0.0, %v1581
    %v1583 = vpop.f32.mrf.mxu0
    %v1584 = vadd.f32 0.0, %v1583
    %1585 = vdwg.mxu0
    %v1586 = vadd.f32 %v273, %v1511
    %v1587 = vadd.f32 %v275, %v1513
    %v1588 = vadd.f32 %v386, %v1582
    %v1589 = vadd.f32 %v388, %v1584
    %v1590 = vmul.f32 %v1586, 0.5
    %v1591 = vtanh.pop %v1590
    %v1592 = vadd.f32 %v1591, 1.0
    %v1593 = vmul.f32 %v1592, 0.5
    %v1594 = vmul.f32 %v1587, 0.5
    %v1595 = vtanh.pop %v1594
    %v1596 = vadd.f32 %v1595, 1.0
    %v1597 = vmul.f32 %v1596, 0.5
    %v1598 = vtanh.pop %v1588
    %v1599 = vmul.f32 %v1589, 0.5
    %v1600 = vtanh.pop %v1599
    %v1601 = vadd.f32 %v1600, 1.0
    %v1602 = vmul.f32 %v1601, 0.5
    %v1603 = vmul.f32 %v1597, %v1441
    %v1604 = vmul.f32 %v1593, %v1598
    %v1605 = vadd.f32 %v1603, %v1604
    %v1606 = vtanh.pop %v1605
    %v1607 = vmul.f32 %v1602, %v1606
    %1608 = vmatprep.subr.mxu0 %v457
    %1609 = vmatpush1.msra.mxu0 %v456
    %1610 = vmatprep.subr.mxu0 %v453
    %1611 = vmatpush1.msra.mxu0 %v452
    %1612 = vmatprep.subr.mxu0 %v449
    %1613 = vmatpush1.msra.mxu0 %v448
    %1614 = vmatprep.subr.mxu0 %v445
    %1615 = vmatpush1.msra.mxu0 %v444
    %1616 = vmatprep.subr.mxu0 %v441
    %1617 = vmatpush1.msra.mxu0 %v440
    %1618 = vmatprep.subr.mxu0 %v437
    %1619 = vmatpush1.msra.mxu0 %v436
    %1620 = vmatprep.subr.mxu0 %v433
    %1621 = vmatpush1.msra.mxu0 %v432
    %1622 = vmatprep.subr.mxu0 %v429
    %1623 = vmatpush1.msra.mxu0 %v428
    %1624 = vmatprep.subr.mxu0 %v425
    %1625 = vmatpush1.msra.mxu0 %v424
    %1626 = vmatprep.subr.mxu0 %v421
    %1627 = vmatpush1.msra.mxu0 %v420
    %1628 = vmatprep.subr.mxu0 %v417
    %1629 = vmatpush1.msra.mxu0 %v416
    %1630 = vmatprep.subr.mxu0 %v413
    %1631 = vmatpush1.msra.mxu0 %v412
    %1632 = vmatprep.subr.mxu0 %v409
    %1633 = vmatpush1.msra.mxu0 %v408
    %1634 = vmatprep.subr.mxu0 %v405
    %1635 = vmatpush1.msra.mxu0 %v404
    %1636 = vmatprep.subr.mxu0 %v401
    %1637 = vmatpush1.msra.mxu0 %v400
    %1638 = vmatprep.subr.mxu0 %v397
    %1639 = vmatpush1.msra.mxu0 %v396
    %1640 = vmatprep.subr.mxu0 0.0
    %1641 = vmatpush2.msra.mxu0 0.0
    %1642 = vmatprep.subr.mxu0 0.0
    %1643 = vmatpush2.msra.mxu0 0.0
    %1644 = vmatprep.subr.mxu0 0.0
    %1645 = vmatpush2.msra.mxu0 0.0
    %1646 = vmatprep.subr.mxu0 0.0
    %1647 = vmatpush2.msra.mxu0 0.0
    %1648 = vmatprep.subr.mxu0 0.0
    %1649 = vmatpush2.msra.mxu0 0.0
    %1650 = vmatprep.subr.mxu0 0.0
    %1651 = vmatpush2.msra.mxu0 0.0
    %1652 = vmatprep.subr.mxu0 0.0
    %1653 = vmatpush2.msra.mxu0 0.0
    %1654 = vmatprep.subr.mxu0 0.0
    %1655 = vmatpush2.msra.mxu0 0.0
    %1656 = vmatprep.subr.mxu0 0.0
    %1657 = vmatpush2.msra.mxu0 0.0
    %1658 = vmatprep.subr.mxu0 0.0
    %1659 = vmatpush2.msra.mxu0 0.0
    %1660 = vmatprep.subr.mxu0 0.0
    %1661 = vmatpush2.msra.mxu0 0.0
    %1662 = vmatprep.subr.mxu0 0.0
    %1663 = vmatpush2.msra.mxu0 0.0
    %1664 = vmatprep.subr.mxu0 0.0
    %1665 = vmatpush2.msra.mxu0 0.0
    %1666 = vmatprep.subr.mxu0 0.0
    %1667 = vmatpush2.msra.mxu0 0.0
    %1668 = vmatprep.subr.mxu0 0.0
    %1669 = vmatpush2.msra.mxu0 0.0
    %1670 = vmatprep.subr.mxu0 0.0
    %1671 = vmatpush2.msra.mxu0 0.0
    %1672 = vmatprep.mubr.f32.mxu0 0.0
    %1673 = vmatmul.mubr.f32.gmra.mxu0 %v1607
    %v1674 = vpop.f32.mrf.mxu0
    %v1675 = vadd.f32 0.0, %v1674
    %v1676 = vpop.f32.mrf.mxu0
    %v1677 = vadd.f32 0.0, %v1676
    %1678 = vdwg.mxu0
    %1679 = vmatprep.subr.mxu0 %v459
    %1680 = vmatpush1.msra.mxu0 %v458
    %1681 = vmatprep.subr.mxu0 %v455
    %1682 = vmatpush1.msra.mxu0 %v454
    %1683 = vmatprep.subr.mxu0 %v451
    %1684 = vmatpush1.msra.mxu0 %v450
    %1685 = vmatprep.subr.mxu0 %v447
    %1686 = vmatpush1.msra.mxu0 %v446
    %1687 = vmatprep.subr.mxu0 %v443
    %1688 = vmatpush1.msra.mxu0 %v442
    %1689 = vmatprep.subr.mxu0 %v439
    %1690 = vmatpush1.msra.mxu0 %v438
    %1691 = vmatprep.subr.mxu0 %v435
    %1692 = vmatpush1.msra.mxu0 %v434
    %1693 = vmatprep.subr.mxu0 %v431
    %1694 = vmatpush1.msra.mxu0 %v430
    %1695 = vmatprep.subr.mxu0 %v427
    %1696 = vmatpush1.msra.mxu0 %v426
    %1697 = vmatprep.subr.mxu0 %v423
    %1698 = vmatpush1.msra.mxu0 %v422
    %1699 = vmatprep.subr.mxu0 %v419
    %1700 = vmatpush1.msra.mxu0 %v418
    %1701 = vmatprep.subr.mxu0 %v415
    %1702 = vmatpush1.msra.mxu0 %v414
    %1703 = vmatprep.subr.mxu0 %v411
    %1704 = vmatpush1.msra.mxu0 %v410
    %1705 = vmatprep.subr.mxu0 %v407
    %1706 = vmatpush1.msra.mxu0 %v406
    %1707 = vmatprep.subr.mxu0 %v403
    %1708 = vmatpush1.msra.mxu0 %v402
    %1709 = vmatprep.subr.mxu0 %v399
    %1710 = vmatpush1.msra.mxu0 %v398
    %1711 = vmatprep.subr.mxu0 0.0
    %1712 = vmatpush2.msra.mxu0 0.0
    %1713 = vmatprep.subr.mxu0 0.0
    %1714 = vmatpush2.msra.mxu0 0.0
    %1715 = vmatprep.subr.mxu0 0.0
    %1716 = vmatpush2.msra.mxu0 0.0
    %1717 = vmatprep.subr.mxu0 0.0
    %1718 = vmatpush2.msra.mxu0 0.0
    %1719 = vmatprep.subr.mxu0 0.0
    %1720 = vmatpush2.msra.mxu0 0.0
    %1721 = vmatprep.subr.mxu0 0.0
    %1722 = vmatpush2.msra.mxu0 0.0
    %1723 = vmatprep.subr.mxu0 0.0
    %1724 = vmatpush2.msra.mxu0 0.0
    %1725 = vmatprep.subr.mxu0 0.0
    %1726 = vmatpush2.msra.mxu0 0.0
    %1727 = vmatprep.subr.mxu0 0.0
    %1728 = vmatpush2.msra.mxu0 0.0
    %1729 = vmatprep.subr.mxu0 0.0
    %1730 = vmatpush2.msra.mxu0 0.0
    %1731 = vmatprep.subr.mxu0 0.0
    %1732 = vmatpush2.msra.mxu0 0.0
    %1733 = vmatprep.subr.mxu0 0.0
    %1734 = vmatpush2.msra.mxu0 0.0
    %1735 = vmatprep.subr.mxu0 0.0
    %1736 = vmatpush2.msra.mxu0 0.0
    %1737 = vmatprep.subr.mxu0 0.0
    %1738 = vmatpush2.msra.mxu0 0.0
    %1739 = vmatprep.subr.mxu0 0.0
    %1740 = vmatpush2.msra.mxu0 0.0
    %1741 = vmatprep.subr.mxu0 0.0
    %1742 = vmatpush2.msra.mxu0 0.0
    %1743 = vmatprep.mubr.f32.mxu0 0.0
    %1744 = vmatmul.mubr.f32.gmra.mxu0 %v1607
    %v1745 = vpop.f32.mrf.mxu0
    %v1746 = vadd.f32 0.0, %v1745
    %v1747 = vpop.f32.mrf.mxu0
    %v1748 = vadd.f32 0.0, %v1747
    %1749 = vdwg.mxu0
    %v1750 = vadd.f32 %v279, %v1675
    %v1751 = vadd.f32 %v281, %v1677
    %v1752 = vadd.f32 %v392, %v1746
    %v1753 = vadd.f32 %v394, %v1748
    %v1754 = vmul.f32 %v1750, 0.5
    %v1755 = vtanh.pop %v1754
    %v1756 = vadd.f32 %v1755, 1.0
    %v1757 = vmul.f32 %v1756, 0.5
    %v1758 = vmul.f32 %v1751, 0.5
    %v1759 = vtanh.pop %v1758
    %v1760 = vadd.f32 %v1759, 1.0
    %v1761 = vmul.f32 %v1760, 0.5
    %v1762 = vtanh.pop %v1752
    %v1763 = vmul.f32 %v1753, 0.5
    %v1764 = vtanh.pop %v1763
    %v1765 = vadd.f32 %v1764, 1.0
    %v1766 = vmul.f32 %v1765, 0.5
    %v1767 = vmul.f32 %v1761, %v1605
    %v1768 = vmul.f32 %v1757, %v1762
    %v1769 = vadd.f32 %v1767, %v1768
    %v1770 = vtanh.pop %v1769
    %v1771 = vmul.f32 %v1766, %v1770
    %1772 = vst [vmem:[#allocation12] sm:$0xff] %v1771
    %1773 = vst [vmem:[#allocation14] sm:$0xff] %v1769
    %v1774 = vld [vmem:[#allocation9] sm:$0xff]
    %v1775 = vld [vmem:[#allocation9 + $0x8] sm:$0xff]
    %v1776 = vld [vmem:[#allocation9 + $0x10] sm:$0xff]
    %v1777 = vld [vmem:[#allocation9 + $0x18] sm:$0xff]
    %v1778 = vld [vmem:[#allocation9 + $0x20] sm:$0xff]
    %v1779 = vld [vmem:[#allocation9 + $0x28] sm:$0xff]
    %v1780 = vld [vmem:[#allocation9 + $0x30] sm:$0xff]
    %v1781 = vld [vmem:[#allocation9 + $0x38] sm:$0xff]
    %v1782 = vld [vmem:[#allocation9 + $0x40] sm:$0xff]
    %v1783 = vld [vmem:[#allocation9 + $0x48] sm:$0xff]
    %v1784 = vld [vmem:[#allocation9 + $0x50] sm:$0xff]
    %v1785 = vld [vmem:[#allocation9 + $0x58] sm:$0xff]
    %v1786 = vld [vmem:[#allocation9 + $0x60] sm:$0xff]
    %v1787 = vld [vmem:[#allocation9 + $0x68] sm:$0xff]
    %v1788 = vld [vmem:[#allocation9 + $0x70] sm:$0xff]
    %v1789 = vld [vmem:[#allocation9 + $0x78] sm:$0xff]
    %v1790 = vld [vmem:[%s5] sm:$0x1]
    %v1792 = vlaneseq
    %v1793 = vshrl.u32 %v1792, 7
    %v1794 = vsub.s32 0, %v1793
    %v1795 = vrot.slane %v1790, %v1794
    %1797 = vmatprep.subr.mxu0 0.0
    %1798 = vmatpush1.msra.mxu0 %v1789
    %1799 = vmatprep.subr.mxu0 0.0
    %1800 = vmatpush1.msra.mxu0 %v1788
    %1801 = vmatprep.subr.mxu0 0.0
    %1802 = vmatpush1.msra.mxu0 %v1787
    %1803 = vmatprep.subr.mxu0 0.0
    %1804 = vmatpush1.msra.mxu0 %v1786
    %1805 = vmatprep.subr.mxu0 0.0
    %1806 = vmatpush1.msra.mxu0 %v1785
    %1807 = vmatprep.subr.mxu0 0.0
    %1808 = vmatpush1.msra.mxu0 %v1784
    %1809 = vmatprep.subr.mxu0 0.0
    %1810 = vmatpush1.msra.mxu0 %v1783
    %1811 = vmatprep.subr.mxu0 0.0
    %1812 = vmatpush1.msra.mxu0 %v1782
    %1813 = vmatprep.subr.mxu0 0.0
    %1814 = vmatpush1.msra.mxu0 %v1781
    %1815 = vmatprep.subr.mxu0 0.0
    %1816 = vmatpush1.msra.mxu0 %v1780
    %1817 = vmatprep.subr.mxu0 0.0
    %1818 = vmatpush1.msra.mxu0 %v1779
    %1819 = vmatprep.subr.mxu0 0.0
    %1820 = vmatpush1.msra.mxu0 %v1778
    %1821 = vmatprep.subr.mxu0 0.0
    %1822 = vmatpush1.msra.mxu0 %v1777
    %1823 = vmatprep.subr.mxu0 0.0
    %1824 = vmatpush1.msra.mxu0 %v1776
    %1825 = vmatprep.subr.mxu0 0.0
    %1826 = vmatpush1.msra.mxu0 %v1775
    %1827 = vmatprep.subr.mxu0 0.0
    %1828 = vmatpush1.msra.mxu0 %v1774
    %1829 = vmatprep.subr.mxu0 0.0
    %1830 = vmatpush2.msra.mxu0 0.0
    %1831 = vmatprep.subr.mxu0 0.0
    %1832 = vmatpush2.msra.mxu0 0.0
    %1833 = vmatprep.subr.mxu0 0.0
    %1834 = vmatpush2.msra.mxu0 0.0
    %1835 = vmatprep.subr.mxu0 0.0
    %1836 = vmatpush2.msra.mxu0 0.0
    %1837 = vmatprep.subr.mxu0 0.0
    %1838 = vmatpush2.msra.mxu0 0.0
    %1839 = vmatprep.subr.mxu0 0.0
    %1840 = vmatpush2.msra.mxu0 0.0
    %1841 = vmatprep.subr.mxu0 0.0
    %1842 = vmatpush2.msra.mxu0 0.0
    %1843 = vmatprep.subr.mxu0 0.0
    %1844 = vmatpush2.msra.mxu0 0.0
    %1845 = vmatprep.subr.mxu0 0.0
    %1846 = vmatpush2.msra.mxu0 0.0
    %1847 = vmatprep.subr.mxu0 0.0
    %1848 = vmatpush2.msra.mxu0 0.0
    %1849 = vmatprep.subr.mxu0 0.0
    %1850 = vmatpush2.msra.mxu0 0.0
    %1851 = vmatprep.subr.mxu0 0.0
    %1852 = vmatpush2.msra.mxu0 0.0
    %1853 = vmatprep.subr.mxu0 0.0
    %1854 = vmatpush2.msra.mxu0 0.0
    %1855 = vmatprep.subr.mxu0 0.0
    %1856 = vmatpush2.msra.mxu0 0.0
    %1857 = vmatprep.subr.mxu0 0.0
    %1858 = vmatpush2.msra.mxu0 0.0
    %1859 = vmatprep.subr.mxu0 0.0
    %1860 = vmatpush2.msra.mxu0 0.0
    %1861 = vmatprep.mubr.f32.mxu0 0.0
    %1862 = vmatmul.mubr.f32.gmra.mxu0 %v1771
    %v1863 = vpop.f32.mrf.mxu0
    %v1864 = vadd.f32 %v1795, %v1863
    %v1865 = vpop.f32.mrf.mxu0
    %1866 = vdwg.mxu0
    %v1867 = vmul.f32 %v1864, 0.5
    %v1868 = vtanh.pop %v1867
    %v1869 = vadd.f32 %v1868, 1.0
    %v1870 = vmul.f32 %v1869, 0.5
    %1871 = vst [vmem:[#allocation11] sm:$0xff] %v1870
    // Predicated region
    $region42: #{tpu_custom_call.1} parent=1 // pred_check
      _
    $region43: #{tpu_custom_call.1} parent=1 // pred_check_branch
      %1873 = sbr.rel (0) target = $region45
    $region44: #{tpu_custom_call.1} parent=1 // pred_region
      %s1875 = ssub.s32 128, 128
      %1876 = vsyncadd [#allocation5], %s1875
      %s1878 = sshll.u32 [#allocation11], 4
      %s1879 = int_to_ptr.vmem [resolvable:$true] %s1878
      %1881 = dma.vmem_to_hbm [thread:$0]  %s1879, 128, %s6, [#allocation5]
    $region45: #{tpu_custom_call.1} parent=1 // pred_fallthru
      _
    // Predicated region
    $region46: #{tpu_custom_call.1} parent=1 // pred_check
      _
    $region47: #{tpu_custom_call.1} parent=1 // pred_check_branch
      %1883 = sbr.rel (0) target = $region49
    $region48: #{tpu_custom_call.1} parent=1 // pred_region
      %s1885 = ssub.s32 128, 128
      %1886 = vsyncadd [#allocation13], %s1885
      %s1888 = sshll.u32 [#allocation12], 4
      %s1889 = int_to_ptr.vmem [resolvable:$true] %s1888
      %1891 = dma.vmem_to_hbm [thread:$0]  %s1889, 128, %s7, [#allocation13]
    $region49: #{tpu_custom_call.1} parent=1 // pred_fallthru
      _
    // Predicated region
    $region50: #{tpu_custom_call.1} parent=1 // pred_check
      _
    $region51: #{tpu_custom_call.1} parent=1 // pred_check_branch
      %1893 = sbr.rel (0) target = $region53
    $region52: #{tpu_custom_call.1} parent=1 // pred_region
      %s1895 = ssub.s32 128, 128
      %1896 = vsyncadd [#allocation13], %s1895
      %s1898 = sshll.u32 [#allocation14], 4
      %s1899 = int_to_ptr.vmem [resolvable:$true] %s1898
      %1901 = dma.vmem_to_hbm [thread:$0]  %s1899, 128, %s8, [#allocation13]
    $region53: #{tpu_custom_call.1} parent=1 // pred_fallthru
      _
    // Predicated region
    $region54: #{tpu_custom_call.1} parent=1 // pred_check
      _
    $region55: #{tpu_custom_call.1} parent=1 // pred_check_branch
      %1903 = sbr.rel (0) target = $region57
    $region56: #{tpu_custom_call.1} parent=1 // pred_region
      %1904 = dma.done [#allocation5], 128
    $region57: #{tpu_custom_call.1} parent=1 // pred_fallthru
      _
    // Predicated region
    $region58: #{tpu_custom_call.1} parent=1 // pred_check
      _
    $region59: #{tpu_custom_call.1} parent=1 // pred_check_branch
      %1906 = sbr.rel (0) target = $region61
    $region60: #{tpu_custom_call.1} parent=1 // pred_region
      %1907 = dma.done [#allocation13], 128
    $region61: #{tpu_custom_call.1} parent=1 // pred_fallthru
      _
    // Predicated region
    $region62: #{tpu_custom_call.1} parent=1 // pred_check
      _
    $region63: #{tpu_custom_call.1} parent=1 // pred_check_branch
      %1909 = sbr.rel (0) target = $region65
    $region64: #{tpu_custom_call.1} parent=1 // pred_region
      %1910 = dma.done [#allocation13], 128
    $region65: #{tpu_custom_call.1} parent=1 // pred_fallthru
      _
    %1911 = vsyncpa [#allocation4], 1
    %1912 = vsyncpa [#allocation7], 1
    %1913 = vsyncpa [#allocation10], 1
    %1914 = vsyncpa [#allocation5], 1
    %1915 = vsyncpa [#allocation13], 1

</llo_original>
